<compile_context>
chip_gen: v5e
topology: v5e:2x2
jax: 0.10.0
libtpu: 0.0.40
codegen_flags: <defaults>
</compile_context>

<pallas_src>
import math

import jax
import jax.numpy as jnp
from jax import lax
from jax.experimental import pallas as pl
from jax.experimental.pallas import tpu as pltpu

# ----------------------------- hyper-parameters -----------------------------
B = 2            # batch
L = 8            # protein residues per example
N_LIG = 16       # total ligand nodes
LIG_DIM = 35     # lig_node_dim (module default)
PRO_DIM = 64     # pro_node_dim (scaled down from 256)
H = 32           # hidden_dim (scaled down from 256)
N_CHI_BINS = 8   # n_chi_bins (scaled down from 72)
NBINS = N_CHI_BINS + 1           # bins per chi angle
NCHI = 4
K_CHI = NCHI * NBINS             # 36
NROWS = B * L                    # 16
VOCAB = 21

FOLD_IN = 128    # folded-matmul input lanes: PRO_DIM + K_CHI + VOCAB = 121 <= 128
LIG_PAD = 128    # ligand feature lanes (35 -> 128)
HEAD_W = 128     # folded-head output lanes (NCHI + 2H = 68 -> 128)

# folded-head lane layout
OFF_OFFPRE = 0                 # [0:4)   W_out_offset(h_V) pre-activation
OFF_V = NCHI                   # [4:36)  W_out_pro(h_VS)
OFF_H1 = NCHI + H              # [36:68) W_out_chi layer-1 pre-activation
HEAD_COLS = NCHI + 2 * H       # 68

# lane-aligned output slab: one 128-lane column per field
COL = 128
C_HEAD, C_LOGITS, C_LOGP, C_PROBS, C_OFFSET, C_CHI, C_LIG = range(7)
SLAB_W = 7 * COL

LEAKY = 0.01
OFF_SCALE = 2.0 * math.pi / N_CHI_BINS

assert PRO_DIM + K_CHI + VOCAB <= FOLD_IN
assert HEAD_COLS <= HEAD_W
assert N_LIG == NROWS            # ligand output shares the slab rows

VMEM_SPEC = pl.BlockSpec(memory_space=pltpu.MemorySpace.VMEM)
HP = jax.lax.Precision.HIGHEST


# ================================ fused kernel ===============================
def fused_pack_kernel(
    xf_ref, xl_ref,                       # folded activations, ligand nodes (bf16)
    wf_ref, bf_ref,                       # folded head weight / bias
    w2_ref, b2_ref, w3_ref, b3_ref,       # W_out_chi MLP layers 2, 3
    wlig_ref, blig_ref,                   # lin_node_lig
    slab_ref,                             # single lane-aligned output slab
):
    f32 = jnp.float32
    bf16 = jnp.bfloat16

    # ---- single folded head matmul: [V | prev_probs | onehot(S)] @ W_fold ----
    # TODO(synk): ProteinFeatures.features_encode / EncLayer stack / the
    # CrossAttentionBlocks around h_V and h_VS_out are undefined in the
    # reference file and are skipped; only the defined Linear plumbing is kept.
    head = (jnp.dot(xf_ref[...], wf_ref[...], preferred_element_type=f32)
            + bf_ref[...])                                     # (n, 128) f32

    # ---- W_out_chi MLP layers 2/3 (ReLU).  w2 is lifted onto the full head
    # width (zero rows outside the layer-1 lanes) so no lane extraction of h1.
    # TODO(synk): the `MLP` class is not defined in the reference file; a
    # standard 3-linear-layer ReLU MLP is assumed.
    h_act = jnp.maximum(head, 0.0).astype(bf16)
    h2 = jnp.maximum(
        jnp.dot(h_act, w2_ref[...], preferred_element_type=f32) + b2_ref[...], 0.0)
    logits = (jnp.dot(h2.astype(bf16), w3_ref[...], preferred_element_type=f32)
              + b3_ref[...])                                   # (n, 36) f32

    # ---- vectorized per-chi softmax / log_softmax (per-SEGMENT max) ----
    chi_i = lax.broadcasted_iota(jnp.int32, (NCHI, K_CHI), 0)
    lane_i = lax.broadcasted_iota(jnp.int32, (NCHI, K_CHI), 1)
    loc = lane_i - chi_i * NBINS                               # local bin index
    seg = jnp.logical_and(loc >= 0, loc < NBINS)               # (4, 36) segment mask
    seg_f = seg.astype(f32)

    lm = jnp.where(seg[None], logits[:, None, :], -jnp.inf)    # (n, 4, 36)
    m4 = jnp.max(lm, axis=-1)                                  # per-segment max (n, 4)
    m_full = jnp.dot(m4, seg_f, preferred_element_type=f32)    # broadcast back (n, 36)
    z = logits - m_full
    e = jnp.exp(z)
    s4 = jnp.sum(jnp.where(seg[None], e[:, None, :], 0.0), axis=-1)   # (n, 4)
    s_full = jnp.dot(s4, seg_f, preferred_element_type=f32)    # (n, 36)
    logp = z - jnp.log(s_full)
    probs = e / s_full                 # exact reciprocal -> consistent with logp

    # ---- offset head: 2*pi/n_chi_bins * sigmoid(W_out_offset(h_V)) ----
    off_pre = head[:, :NCHI]                                   # lanes 0:4, no rotate
    offset = OFF_SCALE * jax.nn.sigmoid(off_pre)               # (n, 4)

    # ---- _chi_prediction_from_probs (strategy='mode'): vectorized first-argmax
    loc_f = loc.astype(f32)
    pm = jnp.where(seg[None], probs[:, None, :], -1.0)         # (n, 4, 36)
    pmax = jnp.max(pm, axis=-1, keepdims=True)                 # (n, 4, 1)
    cand = jnp.where(jnp.logical_and(seg[None], pm == pmax),
                     loc_f[None], float(NBINS))
    first = jnp.min(cand, axis=-1, keepdims=True)              # first argmax (n, 4, 1)
    binrad = jnp.where(loc < N_CHI_BINS,
                       loc_f * (2.0 * math.pi / N_CHI_BINS) - math.pi, 0.0)
    rad = jnp.sum(jnp.where(jnp.logical_and(seg[None], loc_f[None] == first),
                            binrad[None], 0.0), axis=-1)       # (n, 4)
    # NOTE: the torch forward looks up 'chi_bin_offset' (missing key) and falls
    # back to a random offset; here the predicted deterministic offset is used.
    chi_unmasked = rad + offset        # aatype chi mask applied in the wrapper

    # ---- ligand branch: lin_node_lig = Linear(35->H) + LeakyReLU ----
    # TODO(synk): MPNNL graph-conv layers / to_dense_batch / CrossAttentionBlock
    # are undefined in the reference file and are skipped.
    yl = (jnp.dot(xl_ref[...], wlig_ref[...], preferred_element_type=f32)
          + blig_ref[...])
    yl = jnp.where(yl > 0, yl, LEAKY * yl)

    # ---- lane-ALIGNED slab stores: each field -> its own 128-lane column ----
    def col(x):
        w = x.shape[-1]
        if w == COL:
            return x
        return jnp.concatenate([x, jnp.zeros((x.shape[0], COL - w), f32)], axis=-1)

    slab_ref[:, C_HEAD * COL:(C_HEAD + 1) * COL] = head
    slab_ref[:, C_LOGITS * COL:(C_LOGITS + 1) * COL] = col(logits)
    slab_ref[:, C_LOGP * COL:(C_LOGP + 1) * COL] = col(logp)
    slab_ref[:, C_PROBS * COL:(C_PROBS + 1) * COL] = col(probs)
    slab_ref[:, C_OFFSET * COL:(C_OFFSET + 1) * COL] = col(offset)
    slab_ref[:, C_CHI * COL:(C_CHI + 1) * COL] = col(chi_unmasked)
    slab_ref[:, C_LIG * COL:(C_LIG + 1) * COL] = col(yl)


# ========================= one-time weight preparation =======================
def prepare_params(params):
    """Fold / pad all weights once (params-only, hoisted out of the forward)."""
    f32 = jnp.float32
    bf16 = jnp.bfloat16

    # merged head weight applied to h_VS = [h_V | h_S]:
    # output lanes [offset(4) | W_out_pro(32) | W_out_chi.l1(32)]
    woff_full = jnp.zeros((2 * H, NCHI), f32).at[:H, :].set(params["woff"])
    whead = jnp.concatenate([woff_full, params["wpro"], params["w1"]], axis=1)
    bhead = jnp.concatenate([params["boff"], params["bpro"], params["b1"]], axis=1)

    # map from x_fold = [V | prev_probs | onehot(S)] to h_VS
    wmap = (jnp.zeros((FOLD_IN, 2 * H), f32)
            .at[:PRO_DIM, :H].set(params["wv"])
            .at[PRO_DIM:PRO_DIM + K_CHI, :H].set(params["wr"])
            .at[PRO_DIM + K_CHI:PRO_DIM + K_CHI + VOCAB, H:].set(params["w_seq"]))
    bvs = jnp.concatenate([params["bv"] + params["br"],
                           jnp.zeros((1, H), f32)], axis=-1)

    w_fold = jnp.zeros((FOLD_IN, HEAD_W), f32).at[:, :HEAD_COLS].set(
        jnp.dot(wmap, whead, precision=HP))
    b_fold = jnp.zeros((1, HEAD_W), f32).at[:, :HEAD_COLS].set(
        jnp.dot(bvs, whead, precision=HP) + bhead)

    # W_out_chi layer-2 lifted to the full head width (rows = l1 lanes only)
    w2_big = jnp.zeros((HEAD_W, H), f32).at[OFF_H1:OFF_H1 + H, :].set(params["w2"])

    # ligand Linear, padded to 128 input lanes
    wlig = jnp.zeros((LIG_PAD, H), f32).at[:LIG_DIM, :].set(params["lig_w"])

    return {
        "w_fold": w_fold.astype(bf16), "b_fold": b_fold,
        "w2": w2_big.astype(bf16), "b2": params["b2"],
        "w3": params["w3"].astype(bf16), "b3": params["b3"],
        "wlig": wlig.astype(bf16), "blig": params["lig_b"],
        "chi_tab": params["chi_angles_mask"],
    }


# ================================= wrapper ==================================
def pack_chi_head_forward(prepped, x_l, V, S, aatype, prev_SC_D_probs):
    f32 = jnp.float32
    n = NROWS

    # per-call activation packing only (weight packing lives in prepare_params).
    # NOTE: S / aatype must be < VOCAB (=21); out-of-range ids give a zero
    # embedding row / zero chi mask (same as the previous behaviour).
    s1h = jax.nn.one_hot(S.reshape(-1), VOCAB, dtype=f32)               # (n, 21)
    x_fold = jnp.concatenate(
        [V.reshape(n, PRO_DIM), prev_SC_D_probs.reshape(n, K_CHI), s1h,
         jnp.zeros((n, FOLD_IN - PRO_DIM - K_CHI - VOCAB), f32)],
        axis=-1).astype(jnp.bfloat16)
    xl_pad = jnp.concatenate(
        [x_l, jnp.zeros((N_LIG, LIG_PAD - LIG_DIM), f32)],
        axis=-1).astype(jnp.bfloat16)

    slab = pl.pallas_call(
        fused_pack_kernel,
        out_shape=jax.ShapeDtypeStruct((n, SLAB_W), f32),
        in_specs=[VMEM_SPEC] * 10,
        out_specs=VMEM_SPEC,
    )(x_fold, xl_pad,
      prepped["w_fold"], prepped["b_fold"],
      prepped["w2"], prepped["b2"], prepped["w3"], prepped["b3"],
      prepped["wlig"], prepped["blig"])

    # ---- wrapper-side slicing of the lane-aligned slab (pure layout) ----
    head = slab[:, C_HEAD * COL:C_HEAD * COL + HEAD_COLS]
    hvs_out = head[:, OFF_V:OFF_V + H]
    chi_logits = slab[:, C_LOGITS * COL:C_LOGITS * COL + K_CHI]
    chi_log_probs = slab[:, C_LOGP * COL:C_LOGP * COL + K_CHI]
    chi_probs = slab[:, C_PROBS * COL:C_PROBS * COL + K_CHI]
    offset = slab[:, C_OFFSET * COL:C_OFFSET * COL + NCHI]
    chi_unmasked = slab[:, C_CHI * COL:C_CHI * COL + NCHI]
    lig_nodes = slab[:, C_LIG * COL:C_LIG * COL + H]

    # aatype chi mask: trivial 16-row gather kept in XLA (out of the kernel)
    chi_mask = prepped["chi_tab"][aatype.reshape(-1)]                   # (n, 4)
    final_SC_D = chi_mask * chi_unmasked

    # TODO(synk): get_atom14_coords / recycling loop / chi_loss depend on
    # undefined helpers (atom14 machinery, loss fns) and are not implemented.
    return {
        "V": hvs_out.reshape(B, L, H),
        "chi_logits": chi_logits.reshape(B, L, NCHI, NBINS),
        "chi_log_probs": chi_log_probs.reshape(B, L, NCHI, NBINS),
        "chi_probs": chi_probs.reshape(B, L, NCHI, NBINS),
        "offset": offset.reshape(B, L, NCHI),
        "chi_mask": chi_mask.reshape(B, L, NCHI),
        "final_SC_D": final_SC_D.reshape(B, L, NCHI),
        "lig_nodes": lig_nodes,
    }


pack_chi_head_forward_jit = jax.jit(pack_chi_head_forward)


# ============================ pure-JAX reference ============================
def reference_forward(params, x_l, V, S, aatype, prev_SC_D_probs):
    n = NROWS
    dot = lambda a, b: jnp.dot(a, b, precision=HP)
    yl = dot(x_l, params["lig_w"]) + params["lig_b"]
    yl = jnp.where(yl > 0, yl, LEAKY * yl)
    v_flat = V.reshape(n, PRO_DIM)
    probs_flat = prev_SC_D_probs.reshape(n, K_CHI)
    hv = (dot(v_flat, params["wv"]) + params["bv"]
          + dot(probs_flat, params["wr"]) + params["br"])
    hs = params["w_seq"][S.reshape(-1)]
    hvs = jnp.concatenate([hv, hs], axis=-1)
    hvs_out = dot(hvs, params["wpro"]) + params["bpro"]
    h1 = jax.nn.relu(dot(hvs, params["w1"]) + params["b1"])
    h2 = jax.nn.relu(dot(h1, params["w2"]) + params["b2"])
    logits = (dot(h2, params["w3"]) + params["b3"]).reshape(n, NCHI, NBINS)
    logp = jax.nn.log_softmax(logits, axis=-1)
    probs = jax.nn.softmax(logits, axis=-1)
    offset = OFF_SCALE * jax.nn.sigmoid(dot(hv, params["woff"]) + params["boff"])
    chi_mask = params["chi_angles_mask"][aatype.reshape(-1)]
    return {
        "V": hvs_out.reshape(B, L, H),
        "chi_logits": logits.reshape(B, L, NCHI, NBINS),
        "chi_log_probs": logp.reshape(B, L, NCHI, NBINS),
        "chi_probs": probs.reshape(B, L, NCHI, NBINS),
        "offset": offset.reshape(B, L, NCHI),
        "chi_mask": chi_mask.reshape(B, L, NCHI),
        "lig_nodes": yl,
    }


# ============================ parameter setup ===============================
def xavier(key, shape):
    fan_in, fan_out = shape[0], shape[1]
    lim = math.sqrt(6.0 / (fan_in + fan_out))
    return jax.random.uniform(key, shape, jnp.float32, -lim, lim)


def init_params(key):
    ks = list(jax.random.split(key, 16))
    p = {}
    p["lig_w"] = xavier(ks[0], (LIG_DIM, H))
    p["lig_b"] = jnp.zeros((1, H), jnp.float32)
    p["wv"] = xavier(ks[1], (PRO_DIM, H))
    p["bv"] = jnp.zeros((1, H), jnp.float32)
    p["wr"] = xavier(ks[2], (K_CHI, H))             # W_recycle_SC_D_probs
    p["br"] = jnp.zeros((1, H), jnp.float32)
    p["w_seq"] = xavier(ks[3], (VOCAB, H))          # W_seq embedding
    p["wpro"] = xavier(ks[4], (2 * H, H))           # W_out_pro
    p["bpro"] = jnp.zeros((1, H), jnp.float32)
    p["w1"] = xavier(ks[5], (2 * H, H))             # W_out_chi MLP layer 1
    p["b1"] = jnp.zeros((1, H), jnp.float32)
    p["w2"] = xavier(ks[6], (H, H))
    p["b2"] = jnp.zeros((1, H), jnp.float32)
    p["w3"] = xavier(ks[7], (H, K_CHI))
    p["b3"] = jnp.zeros((1, K_CHI), jnp.float32)
    p["woff"] = xavier(ks[8], (H, NCHI))            # W_out_offset
    p["boff"] = jnp.zeros((1, NCHI), jnp.float32)
    # TODO(synk): rc.chi_angles_mask table is external; use a deterministic
    # synthetic (21, 4) binary mask with the same semantics.
    p["chi_angles_mask"] = (
        jax.random.uniform(ks[9], (VOCAB, NCHI)) > 0.3
    ).astype(jnp.float32)
    return p


# ================================== main ====================================
if __name__ == "__main__":
    key = jax.random.PRNGKey(0)
    kp, kx, kv, ks_seq, ka = jax.random.split(key, 5)

    params = init_params(kp)
    prepped = prepare_params(params)   # one-time weight folding (not per call)

    x_l = jax.random.normal(kx, (N_LIG, LIG_DIM), jnp.float32)          # ligand nodes
    V = jax.random.normal(kv, (B, L, PRO_DIM), jnp.float32)             # protein node feats
    S = jax.random.randint(ks_seq, (B, L), 0, VOCAB)                    # sequence tokens
    aatype = jax.random.randint(ka, (B, L), 0, VOCAB)                   # aa types
    prev_probs = jnp.zeros((B, L, NCHI, NBINS), jnp.float32)            # prevs['pred_SC_D_probs']

    out = pack_chi_head_forward_jit(prepped, x_l, V, S, aatype, prev_probs)
    jax.block_until_ready(out)

    ref = reference_forward(params, x_l, V, S, aatype, prev_probs)

    # ---- correctness vs the f32-highest pure-JAX reference.  Kernel MXU
    # operands are bf16 (f32 accumulate), so tolerances reflect bf16 rounding.
    assert jnp.allclose(out["V"], ref["V"], atol=5e-2, rtol=5e-2)
    assert jnp.allclose(out["chi_logits"], ref["chi_logits"], atol=5e-2, rtol=5e-2)
    assert jnp.allclose(out["chi_log_probs"], ref["chi_log_probs"], atol=1e-1, rtol=5e-2)
    assert jnp.allclose(out["chi_probs"], ref["chi_probs"], atol=2e-2)
    assert jnp.allclose(out["offset"], ref["offset"], atol=1e-2)
    assert jnp.allclose(out["chi_mask"], ref["chi_mask"], atol=1e-6)
    assert jnp.allclose(out["lig_nodes"], ref["lig_nodes"], atol=5e-2, rtol=5e-2)

    # chi prediction: validate argmax/bin_rad/offset/mask logic against
    # jnp.argmax applied to the kernel's own probabilities (exact consistency).
    bin_rad = jnp.concatenate(
        [jnp.arange(N_CHI_BINS, dtype=jnp.float32) * (2 * math.pi / N_CHI_BINS)
         - math.pi, jnp.zeros((1,), jnp.float32)])
    chi_bin_k = jnp.argmax(out["chi_probs"], axis=-1)
    chi_from_k = out["chi_mask"] * (bin_rad[chi_bin_k] + out["offset"])
    assert jnp.allclose(out["final_SC_D"], chi_from_k, atol=1e-5)

    # probability sanity (probs and exp(log_probs) share the exact same
    # per-segment normalizer in-kernel; tolerance covers bf16 MXU rounding
    # in the tiny segment-broadcast dots).
    ps = out["chi_probs"].sum(-1)
    assert jnp.allclose(ps, jnp.ones_like(ps), atol=1e-2)
    lps = jnp.exp(out["chi_log_probs"]).sum(-1)
    assert jnp.allclose(lps, jnp.ones_like(lps), atol=1e-2)
    assert out["final_SC_D"].shape == (B, L, NCHI)

    print("KERNEL_OK")
</pallas_src>

<mosaic_0001>
module attributes {stable_mosaic.version = 11 : i64} {
  func.func @fused_pack_kernel(%arg0: memref<16x128xbf16, #tpu.memory_space<vmem>>, %arg1: memref<16x128xbf16, #tpu.memory_space<vmem>>, %arg2: memref<128x128xbf16, #tpu.memory_space<vmem>>, %arg3: memref<1x128xf32, #tpu.memory_space<vmem>>, %arg4: memref<128x32xbf16, #tpu.memory_space<vmem>>, %arg5: memref<1x32xf32, #tpu.memory_space<vmem>>, %arg6: memref<32x36xbf16, #tpu.memory_space<vmem>>, %arg7: memref<1x36xf32, #tpu.memory_space<vmem>>, %arg8: memref<128x32xbf16, #tpu.memory_space<vmem>>, %arg9: memref<1x32xf32, #tpu.memory_space<vmem>>, %arg10: memref<16x896xf32, #tpu.memory_space<vmem>>) attributes {dimension_semantics = [], scalar_prefetch = 0 : i64, scratch_operands = 0 : i64, tpu.core_type = #tpu.core_type<tc>} {
    %c0 = arith.constant 0 : index
    %c0_0 = arith.constant 0 : index
    %0 = vector.load %arg0[%c0, %c0_0] : memref<16x128xbf16, #tpu.memory_space<vmem>>, vector<16x128xbf16>
    %c0_1 = arith.constant 0 : index
    %c0_2 = arith.constant 0 : index
    %1 = vector.load %arg2[%c0_1, %c0_2] : memref<128x128xbf16, #tpu.memory_space<vmem>>, vector<128x128xbf16>
    %cst = arith.constant dense<0.000000e+00> : vector<16x128xf32>
    %2 = tpu.matmul %0, %1, %cst {dimension_numbers = #tpu.dot_dimension_numbers<[1], [0], [0], [1], [0, 0, 1, 1], [], []>} : vector<16x128xbf16>, vector<128x128xbf16>, vector<16x128xf32> -> vector<16x128xf32>
    %c0_3 = arith.constant 0 : index
    %c0_4 = arith.constant 0 : index
    %3 = vector.load %arg3[%c0_3, %c0_4] : memref<1x128xf32, #tpu.memory_space<vmem>>, vector<1x128xf32>
    %4 = vector.broadcast %3 : vector<1x128xf32> to vector<16x128xf32>
    %5 = arith.addf %2, %4 : vector<16x128xf32>
    %cst_5 = arith.constant 0.000000e+00 : f32
    %6 = vector.broadcast %cst_5 : f32 to vector<16x128xf32>
    %7 = arith.maximumf %5, %6 : vector<16x128xf32>
    %8 = arith.truncf %7 : vector<16x128xf32> to vector<16x128xbf16>
    %c0_6 = arith.constant 0 : index
    %c0_7 = arith.constant 0 : index
    %9 = vector.load %arg4[%c0_6, %c0_7] : memref<128x32xbf16, #tpu.memory_space<vmem>>, vector<128x32xbf16>
    %cst_8 = arith.constant dense<0.000000e+00> : vector<16x32xf32>
    %10 = tpu.matmul %8, %9, %cst_8 {dimension_numbers = #tpu.dot_dimension_numbers<[1], [0], [0], [1], [0, 0, 1, 1], [], []>} : vector<16x128xbf16>, vector<128x32xbf16>, vector<16x32xf32> -> vector<16x32xf32>
    %c0_9 = arith.constant 0 : index
    %c0_10 = arith.constant 0 : index
    %11 = vector.load %arg5[%c0_9, %c0_10] : memref<1x32xf32, #tpu.memory_space<vmem>>, vector<1x32xf32>
    %12 = vector.broadcast %11 : vector<1x32xf32> to vector<16x32xf32>
    %13 = arith.addf %10, %12 : vector<16x32xf32>
    %cst_11 = arith.constant 0.000000e+00 : f32
    %14 = vector.broadcast %cst_11 : f32 to vector<16x32xf32>
    %15 = arith.maximumf %13, %14 : vector<16x32xf32>
    %16 = arith.truncf %15 : vector<16x32xf32> to vector<16x32xbf16>
    %c0_12 = arith.constant 0 : index
    %c0_13 = arith.constant 0 : index
    %17 = vector.load %arg6[%c0_12, %c0_13] : memref<32x36xbf16, #tpu.memory_space<vmem>>, vector<32x36xbf16>
    %cst_14 = arith.constant dense<0.000000e+00> : vector<16x36xf32>
    %18 = tpu.matmul %16, %17, %cst_14 {dimension_numbers = #tpu.dot_dimension_numbers<[1], [0], [0], [1], [0, 0, 1, 1], [], []>} : vector<16x32xbf16>, vector<32x36xbf16>, vector<16x36xf32> -> vector<16x36xf32>
    %c0_15 = arith.constant 0 : index
    %c0_16 = arith.constant 0 : index
    %19 = vector.load %arg7[%c0_15, %c0_16] : memref<1x36xf32, #tpu.memory_space<vmem>>, vector<1x36xf32>
    %20 = vector.broadcast %19 : vector<1x36xf32> to vector<16x36xf32>
    %21 = arith.addf %18, %20 : vector<16x36xf32>
    %22 = tpu.iota {dimensions = array<i32: 0>} : vector<4x36xi32>
    %23 = tpu.iota {dimensions = array<i32: 1>} : vector<4x36xi32>
    %c9_i32 = arith.constant 9 : i32
    %24 = vector.broadcast %c9_i32 : i32 to vector<4x36xi32>
    %25 = arith.muli %22, %24 : vector<4x36xi32>
    %26 = arith.subi %23, %25 : vector<4x36xi32>
    %c0_i32 = arith.constant 0 : i32
    %27 = vector.broadcast %c0_i32 : i32 to vector<4x36xi32>
    %28 = arith.cmpi sge, %26, %27 : vector<4x36xi32>
    %c9_i32_17 = arith.constant 9 : i32
    %29 = vector.broadcast %c9_i32_17 : i32 to vector<4x36xi32>
    %30 = arith.cmpi slt, %26, %29 : vector<4x36xi32>
    %31 = arith.andi %28, %30 : vector<4x36xi1>
    %32 = arith.extui %31 : vector<4x36xi1> to vector<4x36xi32>
    %33 = arith.sitofp %32 : vector<4x36xi32> to vector<4x36xf32>
    %34 = vector.shape_cast %31 : vector<4x36xi1> to vector<1x4x36xi1>
    %35 = vector.shape_cast %21 : vector<16x36xf32> to vector<16x1x36xf32>
    %cst_18 = arith.constant 0xFF800000 : f32
    %36 = vector.shape_cast %34 : vector<1x4x36xi1> to vector<1x4x36xi1>
    %37 = vector.broadcast %36 : vector<1x4x36xi1> to vector<16x4x36xi1>
    %38 = vector.shape_cast %35 : vector<16x1x36xf32> to vector<16x1x36xf32>
    %39 = vector.broadcast %38 : vector<16x1x36xf32> to vector<16x4x36xf32>
    %40 = vector.broadcast %cst_18 : f32 to vector<16x4x36xf32>
    %41 = arith.select %37, %39, %40 : vector<16x4x36xi1>, vector<16x4x36xf32>
    %cst_19 = arith.constant dense<0xFF800000> : vector<16x4xf32>
    %42 = vector.multi_reduction <maximumf>, %41, %cst_19 [2] : vector<16x4x36xf32> to vector<16x4xf32>
    %cst_20 = arith.constant dense<0.000000e+00> : vector<16x36xf32>
    %43 = tpu.matmul %42, %33, %cst_20 {dimension_numbers = #tpu.dot_dimension_numbers<[1], [0], [0], [1], [0, 0, 1, 1], [], []>} : vector<16x4xf32>, vector<4x36xf32>, vector<16x36xf32> -> vector<16x36xf32>
    %44 = arith.subf %21, %43 : vector<16x36xf32>
    %45 = math.exp %44 : vector<16x36xf32>
    %46 = vector.shape_cast %31 : vector<4x36xi1> to vector<1x4x36xi1>
    %47 = vector.shape_cast %45 : vector<16x36xf32> to vector<16x1x36xf32>
    %cst_21 = arith.constant 0.000000e+00 : f32
    %48 = vector.shape_cast %46 : vector<1x4x36xi1> to vector<1x4x36xi1>
    %49 = vector.broadcast %48 : vector<1x4x36xi1> to vector<16x4x36xi1>
    %50 = vector.shape_cast %47 : vector<16x1x36xf32> to vector<16x1x36xf32>
    %51 = vector.broadcast %50 : vector<16x1x36xf32> to vector<16x4x36xf32>
    %52 = vector.broadcast %cst_21 : f32 to vector<16x4x36xf32>
    %53 = arith.select %49, %51, %52 : vector<16x4x36xi1>, vector<16x4x36xf32>
    %cst_22 = arith.constant dense<0.000000e+00> : vector<16x4xf32>
    %54 = vector.multi_reduction <add>, %53, %cst_22 [2] : vector<16x4x36xf32> to vector<16x4xf32>
    %cst_23 = arith.constant dense<0.000000e+00> : vector<16x36xf32>
    %55 = tpu.matmul %54, %33, %cst_23 {dimension_numbers = #tpu.dot_dimension_numbers<[1], [0], [0], [1], [0, 0, 1, 1], [], []>} : vector<16x4xf32>, vector<4x36xf32>, vector<16x36xf32> -> vector<16x36xf32>
    %56 = math.log %55 : vector<16x36xf32>
    %57 = arith.subf %44, %56 : vector<16x36xf32>
    %58 = arith.divf %45, %55 : vector<16x36xf32>
    %59 = vector.extract_strided_slice %5 {offsets = [0, 0], sizes = [16, 4], strides = [1, 1]} : vector<16x128xf32> to vector<16x4xf32>
    %60 = arith.negf %59 : vector<16x4xf32>
    %61 = math.exp %60 : vector<16x4xf32>
    %cst_24 = arith.constant 1.000000e+00 : f32
    %62 = vector.broadcast %cst_24 : f32 to vector<16x4xf32>
    %63 = arith.addf %62, %61 : vector<16x4xf32>
    %64 = arith.divf %62, %63 : vector<16x4xf32>
    %cst_25 = arith.constant 0.785398185 : f32
    %65 = vector.broadcast %cst_25 : f32 to vector<16x4xf32>
    %66 = arith.mulf %65, %64 : vector<16x4xf32>
    %67 = arith.sitofp %26 : vector<4x36xi32> to vector<4x36xf32>
    %68 = vector.shape_cast %31 : vector<4x36xi1> to vector<1x4x36xi1>
    %69 = vector.shape_cast %58 : vector<16x36xf32> to vector<16x1x36xf32>
    %cst_26 = arith.constant -1.000000e+00 : f32
    %70 = vector.shape_cast %68 : vector<1x4x36xi1> to vector<1x4x36xi1>
    %71 = vector.broadcast %70 : vector<1x4x36xi1> to vector<16x4x36xi1>
    %72 = vector.shape_cast %69 : vector<16x1x36xf32> to vector<16x1x36xf32>
    %73 = vector.broadcast %72 : vector<16x1x36xf32> to vector<16x4x36xf32>
    %74 = vector.broadcast %cst_26 : f32 to vector<16x4x36xf32>
    %75 = arith.select %71, %73, %74 : vector<16x4x36xi1>, vector<16x4x36xf32>
    %cst_27 = arith.constant dense<0xFF800000> : vector<16x4xf32>
    %76 = vector.multi_reduction <maximumf>, %75, %cst_27 [2] : vector<16x4x36xf32> to vector<16x4xf32>
    %77 = vector.shape_cast %76 : vector<16x4xf32> to vector<16x4x1xf32>
    %78 = vector.shape_cast %31 : vector<4x36xi1> to vector<1x4x36xi1>
    %79 = vector.broadcast %77 : vector<16x4x1xf32> to vector<16x4x36xf32>
    %80 = arith.cmpf oeq, %75, %79 : vector<16x4x36xf32>
    %81 = vector.broadcast %78 : vector<1x4x36xi1> to vector<16x4x36xi1>
    %82 = arith.andi %81, %80 : vector<16x4x36xi1>
    %83 = vector.shape_cast %67 : vector<4x36xf32> to vector<1x4x36xf32>
    %cst_28 = arith.constant 9.000000e+00 : f32
    %84 = vector.shape_cast %83 : vector<1x4x36xf32> to vector<1x4x36xf32>
    %85 = vector.broadcast %84 : vector<1x4x36xf32> to vector<16x4x36xf32>
    %86 = vector.broadcast %cst_28 : f32 to vector<16x4x36xf32>
    %87 = arith.select %82, %85, %86 : vector<16x4x36xi1>, vector<16x4x36xf32>
    %cst_29 = arith.constant dense<0x7F800000> : vector<16x4xf32>
    %88 = vector.multi_reduction <minimumf>, %87, %cst_29 [2] : vector<16x4x36xf32> to vector<16x4xf32>
    %89 = vector.shape_cast %88 : vector<16x4xf32> to vector<16x4x1xf32>
    %c8_i32 = arith.constant 8 : i32
    %90 = vector.broadcast %c8_i32 : i32 to vector<4x36xi32>
    %91 = arith.cmpi slt, %26, %90 : vector<4x36xi32>
    %cst_30 = arith.constant 0.785398185 : f32
    %92 = vector.broadcast %cst_30 : f32 to vector<4x36xf32>
    %93 = arith.mulf %67, %92 : vector<4x36xf32>
    %cst_31 = arith.constant 3.14159274 : f32
    %94 = vector.broadcast %cst_31 : f32 to vector<4x36xf32>
    %95 = arith.subf %93, %94 : vector<4x36xf32>
    %cst_32 = arith.constant 0.000000e+00 : f32
    %96 = vector.broadcast %cst_32 : f32 to vector<4x36xf32>
    %97 = arith.select %91, %95, %96 : vector<4x36xi1>, vector<4x36xf32>
    %98 = vector.shape_cast %31 : vector<4x36xi1> to vector<1x4x36xi1>
    %99 = vector.shape_cast %67 : vector<4x36xf32> to vector<1x4x36xf32>
    %100 = vector.broadcast %99 : vector<1x4x36xf32> to vector<16x4x36xf32>
    %101 = vector.broadcast %89 : vector<16x4x1xf32> to vector<16x4x36xf32>
    %102 = arith.cmpf oeq, %100, %101 : vector<16x4x36xf32>
    %103 = vector.broadcast %98 : vector<1x4x36xi1> to vector<16x4x36xi1>
    %104 = arith.andi %103, %102 : vector<16x4x36xi1>
    %105 = vector.shape_cast %97 : vector<4x36xf32> to vector<1x4x36xf32>
    %cst_33 = arith.constant 0.000000e+00 : f32
    %106 = vector.shape_cast %105 : vector<1x4x36xf32> to vector<1x4x36xf32>
    %107 = vector.broadcast %106 : vector<1x4x36xf32> to vector<16x4x36xf32>
    %108 = vector.broadcast %cst_33 : f32 to vector<16x4x36xf32>
    %109 = arith.select %104, %107, %108 : vector<16x4x36xi1>, vector<16x4x36xf32>
    %cst_34 = arith.constant dense<0.000000e+00> : vector<16x4xf32>
    %110 = vector.multi_reduction <add>, %109, %cst_34 [2] : vector<16x4x36xf32> to vector<16x4xf32>
    %111 = arith.addf %110, %66 : vector<16x4xf32>
    %c0_35 = arith.constant 0 : index
    %c0_36 = arith.constant 0 : index
    %112 = vector.load %arg1[%c0_35, %c0_36] : memref<16x128xbf16, #tpu.memory_space<vmem>>, vector<16x128xbf16>
    %c0_37 = arith.constant 0 : index
    %c0_38 = arith.constant 0 : index
    %113 = vector.load %arg8[%c0_37, %c0_38] : memref<128x32xbf16, #tpu.memory_space<vmem>>, vector<128x32xbf16>
    %cst_39 = arith.constant dense<0.000000e+00> : vector<16x32xf32>
    %114 = tpu.matmul %112, %113, %cst_39 {dimension_numbers = #tpu.dot_dimension_numbers<[1], [0], [0], [1], [0, 0, 1, 1], [], []>} : vector<16x128xbf16>, vector<128x32xbf16>, vector<16x32xf32> -> vector<16x32xf32>
    %c0_40 = arith.constant 0 : index
    %c0_41 = arith.constant 0 : index
    %115 = vector.load %arg9[%c0_40, %c0_41] : memref<1x32xf32, #tpu.memory_space<vmem>>, vector<1x32xf32>
    %116 = vector.broadcast %115 : vector<1x32xf32> to vector<16x32xf32>
    %117 = arith.addf %114, %116 : vector<16x32xf32>
    %cst_42 = arith.constant 0.000000e+00 : f32
    %118 = vector.broadcast %cst_42 : f32 to vector<16x32xf32>
    %119 = arith.cmpf ogt, %117, %118 : vector<16x32xf32>
    %cst_43 = arith.constant 0.00999999977 : f32
    %120 = vector.broadcast %cst_43 : f32 to vector<16x32xf32>
    %121 = arith.mulf %120, %117 : vector<16x32xf32>
    %122 = arith.select %119, %117, %121 : vector<16x32xi1>, vector<16x32xf32>
    %c0_44 = arith.constant 0 : index
    %c0_45 = arith.constant 0 : index
    %123 = vector.load %arg10[%c0_44, %c0_45] : memref<16x896xf32, #tpu.memory_space<vmem>>, vector<16x128xf32>
    tpu.vector_store %arg10[%c0_44, %c0_45], %5 {strides = array<i32>} : memref<16x896xf32, #tpu.memory_space<vmem>>, vector<16x128xf32>,
    %cst_46 = arith.constant 0.000000e+00 : f32
    %124 = vector.broadcast %cst_46 : f32 to vector<16x92xf32>
    %125 = tpu.concatenate %21, %124 in 1 : vector<16x36xf32>, vector<16x92xf32> -> vector<16x128xf32>
    %c0_47 = arith.constant 0 : index
    %c128 = arith.constant 128 : index
    %126 = vector.load %arg10[%c0_47, %c128] : memref<16x896xf32, #tpu.memory_space<vmem>>, vector<16x128xf32>
    tpu.vector_store %arg10[%c0_47, %c128], %125 {strides = array<i32>} : memref<16x896xf32, #tpu.memory_space<vmem>>, vector<16x128xf32>,
    %cst_48 = arith.constant 0.000000e+00 : f32
    %127 = vector.broadcast %cst_48 : f32 to vector<16x92xf32>
    %128 = tpu.concatenate %57, %127 in 1 : vector<16x36xf32>, vector<16x92xf32> -> vector<16x128xf32>
    %c0_49 = arith.constant 0 : index
    %c256 = arith.constant 256 : index
    %129 = vector.load %arg10[%c0_49, %c256] : memref<16x896xf32, #tpu.memory_space<vmem>>, vector<16x128xf32>
    tpu.vector_store %arg10[%c0_49, %c256], %128 {strides = array<i32>} : memref<16x896xf32, #tpu.memory_space<vmem>>, vector<16x128xf32>,
    %cst_50 = arith.constant 0.000000e+00 : f32
    %130 = vector.broadcast %cst_50 : f32 to vector<16x92xf32>
    %131 = tpu.concatenate %58, %130 in 1 : vector<16x36xf32>, vector<16x92xf32> -> vector<16x128xf32>
    %c0_51 = arith.constant 0 : index
    %c384 = arith.constant 384 : index
    %132 = vector.load %arg10[%c0_51, %c384] : memref<16x896xf32, #tpu.memory_space<vmem>>, vector<16x128xf32>
    tpu.vector_store %arg10[%c0_51, %c384], %131 {strides = array<i32>} : memref<16x896xf32, #tpu.memory_space<vmem>>, vector<16x128xf32>,
    %cst_52 = arith.constant 0.000000e+00 : f32
    %133 = vector.broadcast %cst_52 : f32 to vector<16x124xf32>
    %134 = tpu.concatenate %66, %133 in 1 : vector<16x4xf32>, vector<16x124xf32> -> vector<16x128xf32>
    %c0_53 = arith.constant 0 : index
    %c512 = arith.constant 512 : index
    %135 = vector.load %arg10[%c0_53, %c512] : memref<16x896xf32, #tpu.memory_space<vmem>>, vector<16x128xf32>
    tpu.vector_store %arg10[%c0_53, %c512], %134 {strides = array<i32>} : memref<16x896xf32, #tpu.memory_space<vmem>>, vector<16x128xf32>,
    %cst_54 = arith.constant 0.000000e+00 : f32
    %136 = vector.broadcast %cst_54 : f32 to vector<16x124xf32>
    %137 = tpu.concatenate %111, %136 in 1 : vector<16x4xf32>, vector<16x124xf32> -> vector<16x128xf32>
    %c0_55 = arith.constant 0 : index
    %c640 = arith.constant 640 : index
    %138 = vector.load %arg10[%c0_55, %c640] : memref<16x896xf32, #tpu.memory_space<vmem>>, vector<16x128xf32>
    tpu.vector_store %arg10[%c0_55, %c640], %137 {strides = array<i32>} : memref<16x896xf32, #tpu.memory_space<vmem>>, vector<16x128xf32>,
    %cst_56 = arith.constant 0.000000e+00 : f32
    %139 = vector.broadcast %cst_56 : f32 to vector<16x96xf32>
    %140 = tpu.concatenate %122, %139 in 1 : vector<16x32xf32>, vector<16x96xf32> -> vector<16x128xf32>
    %c0_57 = arith.constant 0 : index
    %c768 = arith.constant 768 : index
    %141 = vector.load %arg10[%c0_57, %c768] : memref<16x896xf32, #tpu.memory_space<vmem>>, vector<16x128xf32>
    tpu.vector_store %arg10[%c0_57, %c768], %140 {strides = array<i32>} : memref<16x896xf32, #tpu.memory_space<vmem>>, vector<16x128xf32>,
    return
  }
}

</mosaic_0001>

<llo_original>
// kernel: eq.1
$region0: #{eq.1}
  %s0 = inlined_call_operand.vmem [shape: s32[2,8], index: 0, kind: input, shape index: {}]
  %s1 = inlined_call_operand.vmem [shape: s32[16], index: 1, kind: output, shape index: {}]
  $region1: #{eq.1} parent=0
    #allocation0 [shape = 'u8[4096]{0}', space=vmem, size = 0x1000, scoped, tag = 'scoped mem for output reshape']
    #allocation1 [shape = 'u8[4096]{0}', space=vmem, size = 0x1000, scoped, tag = 'scoped mem for input reshape']
    %s3 = ssub.s32 4, 1
    %v4 = vld [vmem:[%s0] sm:%s3]
    %5 = vst [vmem:[#allocation1] sm:%s3] %v4
    %v6 = vld [vmem:[#allocation1] sm:$0x1]
    %vm7 = vcmask 64512
    %8 = vst.msk [vmem:[#allocation0] sm:$0x1] %vm7, %v6
    %s9 = scalar_lea.vmem [#allocation1], 1
    %v10 = vld [vmem:[%s9] sm:$0x1]
    %11 = vrot.lane.b32.xlu0 %v10, 8
    %v12 = vpop.permute.xlu0 %11
    %vm13 = vcmask 130112
    %14 = vst.msk [vmem:[#allocation0] sm:$0x1] %vm13, %v12
    %s16 = ssub.s32 2, 1
    %v17 = vld [vmem:[#allocation0] sm:%s16]
    %s19 = ssub.s32 2, 1
    %20 = vst [vmem:[%s1] sm:%s19] %v17

// kernel: pack_chi_head_forward.1
$region0: #{pack_chi_head_forward.1}
  #allocation0 [shape = 'u32[]', space=smem, size = 0x4, offset = 0x4, fixed_abs, tag = 'smem constant byte address 0x4 - core index']
  #allocation1 [shape = 'u32[72,128]{1,0:T(1,128)}', space=vmem, size = 0x9000, scoped, tag = 'internal scratch']
  %s0 = inlined_call_operand.vmem [shape: bf16[16,128], index: 0, kind: input, shape index: {}]
  %s1 = inlined_call_operand.vmem [shape: bf16[16,128], index: 1, kind: input, shape index: {}]
  %s2 = inlined_call_operand.vmem [shape: bf16[128,128], index: 2, kind: input, shape index: {}]
  %s3 = inlined_call_operand.vmem [shape: f32[1,128], index: 3, kind: input, shape index: {}]
  %s4 = inlined_call_operand.vmem [shape: bf16[128,32], index: 4, kind: input, shape index: {}]
  %s5 = inlined_call_operand.vmem [shape: f32[1,32], index: 5, kind: input, shape index: {}]
  %s6 = inlined_call_operand.vmem [shape: bf16[32,36], index: 6, kind: input, shape index: {}]
  %s7 = inlined_call_operand.vmem [shape: f32[1,36], index: 7, kind: input, shape index: {}]
  %s8 = inlined_call_operand.vmem [shape: bf16[128,32], index: 8, kind: input, shape index: {}]
  %s9 = inlined_call_operand.vmem [shape: f32[1,32], index: 9, kind: input, shape index: {}]
  %s10 = inlined_call_operand.vmem [shape: f32[16,896], index: 10, kind: output, shape index: {}]
  %s11 = sld [smem:[#allocation0]]
  $region50: #{pack_chi_head_forward.1} parent=0
    _
  %s13 = ssub.s32 1, %s11
  %s14 = scalar_select 0, %s13, %s11
  // Predicated region
  $region2: #{pack_chi_head_forward.1} parent=0 // pred_check
    _
  $region3: #{pack_chi_head_forward.1} parent=0 // pred_check_branch
    %16 = sbr.rel (0) target = $region5
  $region4: #{pack_chi_head_forward.1} parent=0 // pred_region
    _
  $region5: #{pack_chi_head_forward.1} parent=0 // pred_fallthru
    _
  // Predicated region
  $region6: #{pack_chi_head_forward.1} parent=0 // pred_check
    _
  $region7: #{pack_chi_head_forward.1} parent=0 // pred_check_branch
    %18 = sbr.rel (0) target = $region9
  $region8: #{pack_chi_head_forward.1} parent=0 // pred_region
    _
  $region9: #{pack_chi_head_forward.1} parent=0 // pred_fallthru
    _
  // Predicated region
  $region10: #{pack_chi_head_forward.1} parent=0 // pred_check
    _
  $region11: #{pack_chi_head_forward.1} parent=0 // pred_check_branch
    %20 = sbr.rel (0) target = $region13
  $region12: #{pack_chi_head_forward.1} parent=0 // pred_region
    _
  $region13: #{pack_chi_head_forward.1} parent=0 // pred_fallthru
    _
  // Predicated region
  $region14: #{pack_chi_head_forward.1} parent=0 // pred_check
    _
  $region15: #{pack_chi_head_forward.1} parent=0 // pred_check_branch
    %22 = sbr.rel (0) target = $region17
  $region16: #{pack_chi_head_forward.1} parent=0 // pred_region
    _
  $region17: #{pack_chi_head_forward.1} parent=0 // pred_fallthru
    _
  // Predicated region
  $region18: #{pack_chi_head_forward.1} parent=0 // pred_check
    _
  $region19: #{pack_chi_head_forward.1} parent=0 // pred_check_branch
    %24 = sbr.rel (0) target = $region21
  $region20: #{pack_chi_head_forward.1} parent=0 // pred_region
    _
  $region21: #{pack_chi_head_forward.1} parent=0 // pred_fallthru
    _
  // Predicated region
  $region22: #{pack_chi_head_forward.1} parent=0 // pred_check
    _
  $region23: #{pack_chi_head_forward.1} parent=0 // pred_check_branch
    %26 = sbr.rel (0) target = $region25
  $region24: #{pack_chi_head_forward.1} parent=0 // pred_region
    _
  $region25: #{pack_chi_head_forward.1} parent=0 // pred_fallthru
    _
  // Predicated region
  $region26: #{pack_chi_head_forward.1} parent=0 // pred_check
    _
  $region27: #{pack_chi_head_forward.1} parent=0 // pred_check_branch
    %28 = sbr.rel (0) target = $region29
  $region28: #{pack_chi_head_forward.1} parent=0 // pred_region
    _
  $region29: #{pack_chi_head_forward.1} parent=0 // pred_fallthru
    _
  // Predicated region
  $region30: #{pack_chi_head_forward.1} parent=0 // pred_check
    _
  $region31: #{pack_chi_head_forward.1} parent=0 // pred_check_branch
    %30 = sbr.rel (0) target = $region33
  $region32: #{pack_chi_head_forward.1} parent=0 // pred_region
    _
  $region33: #{pack_chi_head_forward.1} parent=0 // pred_fallthru
    _
  // Predicated region
  $region34: #{pack_chi_head_forward.1} parent=0 // pred_check
    _
  $region35: #{pack_chi_head_forward.1} parent=0 // pred_check_branch
    %32 = sbr.rel (0) target = $region37
  $region36: #{pack_chi_head_forward.1} parent=0 // pred_region
    _
  $region37: #{pack_chi_head_forward.1} parent=0 // pred_fallthru
    _
  // Predicated region
  $region38: #{pack_chi_head_forward.1} parent=0 // pred_check
    _
  $region39: #{pack_chi_head_forward.1} parent=0 // pred_check_branch
    %34 = sbr.rel (0) target = $region41
  $region40: #{pack_chi_head_forward.1} parent=0 // pred_region
    _
  $region41: #{pack_chi_head_forward.1} parent=0 // pred_fallthru
    _
  %v36 = vld [vmem:[%s0] sm:$0xf]
  %v37 = vld [vmem:[%s0 + $0x4] sm:$0xf]
  %v38 = vld [vmem:[%s2] sm:$0xf]
  %v39 = vld [vmem:[%s2 + $0x4] sm:$0xf]
  %v40 = vld [vmem:[%s2 + $0x8] sm:$0xf]
  %v41 = vld [vmem:[%s2 + $0xc] sm:$0xf]
  %v42 = vld [vmem:[%s2 + $0x10] sm:$0xf]
  %v43 = vld [vmem:[%s2 + $0x14] sm:$0xf]
  %v44 = vld [vmem:[%s2 + $0x18] sm:$0xf]
  %v45 = vld [vmem:[%s2 + $0x1c] sm:$0xf]
  %v46 = vld [vmem:[%s2 + $0x20] sm:$0xf]
  %v47 = vld [vmem:[%s2 + $0x24] sm:$0xf]
  %v48 = vld [vmem:[%s2 + $0x28] sm:$0xf]
  %v49 = vld [vmem:[%s2 + $0x2c] sm:$0xf]
  %v50 = vld [vmem:[%s2 + $0x30] sm:$0xf]
  %v51 = vld [vmem:[%s2 + $0x34] sm:$0xf]
  %v52 = vld [vmem:[%s2 + $0x38] sm:$0xf]
  %v53 = vld [vmem:[%s2 + $0x3c] sm:$0xf]
  %v54 = vld [vmem:[%s3] sm:$0x1]
  %v56 = vperm.slane %v54, 0
  %v60 = vunpack.c.l.b16 %v36
  %v61 = vunpack.c.l.b16 %v37
  %v62 = vpack.c.b16 %v61, %v60
  %v80 = vunpack.c.l.b16 %v38
  %v81 = vunpack.c.l.b16 %v39
  %v82 = vunpack.c.l.b16 %v40
  %v83 = vunpack.c.l.b16 %v41
  %v84 = vunpack.c.l.b16 %v42
  %v85 = vunpack.c.l.b16 %v43
  %v86 = vunpack.c.l.b16 %v44
  %v87 = vunpack.c.l.b16 %v45
  %v88 = vunpack.c.l.b16 %v46
  %v89 = vunpack.c.l.b16 %v47
  %v90 = vunpack.c.l.b16 %v48
  %v91 = vunpack.c.l.b16 %v49
  %v92 = vunpack.c.l.b16 %v50
  %v93 = vunpack.c.l.b16 %v51
  %v94 = vunpack.c.l.b16 %v52
  %v95 = vunpack.c.l.b16 %v53
  %v96 = vpack.c.b16 %v81, %v80
  %v97 = vpack.c.b16 %v83, %v82
  %v98 = vpack.c.b16 %v85, %v84
  %v99 = vpack.c.b16 %v87, %v86
  %v100 = vpack.c.b16 %v89, %v88
  %v101 = vpack.c.b16 %v91, %v90
  %v102 = vpack.c.b16 %v93, %v92
  %v103 = vpack.c.b16 %v95, %v94
  %112 = vmatpush.bf16.msra.mxu0 %v103
  %113 = vmatpush.bf16.msra.mxu0 %v102
  %114 = vmatpush.bf16.msra.mxu0 %v101
  %115 = vmatpush.bf16.msra.mxu0 %v100
  %116 = vmatpush.bf16.msra.mxu0 %v99
  %117 = vmatpush.bf16.msra.mxu0 %v98
  %118 = vmatpush.bf16.msra.mxu0 %v97
  %119 = vmatpush.bf16.msra.mxu0 %v96
  %120 = vmatmul.bf16.gmra.mxu0 %v62
  %v121 = vpop.f32.mrf.mxu0
  %v122 = vadd.f32 %v56, %v121
  %v123 = vpop.f32.mrf.mxu0
  %v124 = vadd.f32 %v56, %v123
  %125 = vdwg.mxu0
  %v126 = vmax.f32 %v122, 0.0
  %v127 = vmax.f32 %v124, 0.0
  %v128 = vpack.c.bf16 %v127, %v126
  %v129 = vld [vmem:[%s4] sm:$0xf]
  %v130 = vld [vmem:[%s4 + $0x4] sm:$0xf]
  %v131 = vld [vmem:[%s4 + $0x8] sm:$0xf]
  %v132 = vld [vmem:[%s4 + $0xc] sm:$0xf]
  %v133 = vld [vmem:[%s4 + $0x10] sm:$0xf]
  %v134 = vld [vmem:[%s4 + $0x14] sm:$0xf]
  %v135 = vld [vmem:[%s4 + $0x18] sm:$0xf]
  %v136 = vld [vmem:[%s4 + $0x1c] sm:$0xf]
  %v137 = vld [vmem:[%s4 + $0x20] sm:$0xf]
  %v138 = vld [vmem:[%s4 + $0x24] sm:$0xf]
  %v139 = vld [vmem:[%s4 + $0x28] sm:$0xf]
  %v140 = vld [vmem:[%s4 + $0x2c] sm:$0xf]
  %v141 = vld [vmem:[%s4 + $0x30] sm:$0xf]
  %v142 = vld [vmem:[%s4 + $0x34] sm:$0xf]
  %v143 = vld [vmem:[%s4 + $0x38] sm:$0xf]
  %v144 = vld [vmem:[%s4 + $0x3c] sm:$0xf]
  %v145 = vld [vmem:[%s5] sm:$0x1]
  %v147 = vperm.slane %v145, 0
  %v165 = vunpack.c.l.b16 %v129
  %v166 = vunpack.c.l.b16 %v130
  %v167 = vunpack.c.l.b16 %v131
  %v168 = vunpack.c.l.b16 %v132
  %v169 = vunpack.c.l.b16 %v133
  %v170 = vunpack.c.l.b16 %v134
  %v171 = vunpack.c.l.b16 %v135
  %v172 = vunpack.c.l.b16 %v136
  %v173 = vunpack.c.l.b16 %v137
  %v174 = vunpack.c.l.b16 %v138
  %v175 = vunpack.c.l.b16 %v139
  %v176 = vunpack.c.l.b16 %v140
  %v177 = vunpack.c.l.b16 %v141
  %v178 = vunpack.c.l.b16 %v142
  %v179 = vunpack.c.l.b16 %v143
  %v180 = vunpack.c.l.b16 %v144
  %v181 = vpack.c.b16 %v166, %v165
  %v182 = vpack.c.b16 %v168, %v167
  %v183 = vpack.c.b16 %v170, %v169
  %v184 = vpack.c.b16 %v172, %v171
  %v185 = vpack.c.b16 %v174, %v173
  %v186 = vpack.c.b16 %v176, %v175
  %v187 = vpack.c.b16 %v178, %v177
  %v188 = vpack.c.b16 %v180, %v179
  %197 = vmatpush.bf16.msra.mxu0 %v188
  %198 = vmatpush.bf16.msra.mxu0 %v187
  %199 = vmatpush.bf16.msra.mxu0 %v186
  %200 = vmatpush.bf16.msra.mxu0 %v185
  %201 = vmatpush.bf16.msra.mxu0 %v184
  %202 = vmatpush.bf16.msra.mxu0 %v183
  %203 = vmatpush.bf16.msra.mxu0 %v182
  %204 = vmatpush.bf16.msra.mxu0 %v181
  %205 = vmatmul.bf16.gmra.mxu0 %v128
  %v206 = vpop.f32.mrf.mxu0
  %v207 = vadd.f32 %v147, %v206
  %v208 = vpop.f32.mrf.mxu0
  %v209 = vadd.f32 %v147, %v208
  %210 = vdwg.mxu0
  %v211 = vmax.f32 %v207, 0.0
  %v212 = vmax.f32 %v209, 0.0
  %v213 = vpack.c.bf16 %v212, %v211
  %v214 = vld [vmem:[%s6] sm:$0xf]
  %v215 = vld [vmem:[%s6 + $0x4] sm:$0xf]
  %v216 = vld [vmem:[%s6 + $0x8] sm:$0xf]
  %v217 = vld [vmem:[%s6 + $0xc] sm:$0xf]
  %v218 = vld [vmem:[%s7] sm:$0x1]
  %v220 = vperm.slane %v218, 0
  %v226 = vunpack.c.l.b16 %v214
  %v227 = vunpack.c.l.b16 %v215
  %v228 = vunpack.c.l.b16 %v216
  %v229 = vunpack.c.l.b16 %v217
  %v230 = vpack.c.b16 %v227, %v226
  %v231 = vpack.c.b16 %v229, %v228
  %vm234 = vcmask 261120
  %v236 = vsel %vm234, %v213, 0
  %238 = vmatpush.bf16.msra.mxu0 0
  %239 = vmatpush.bf16.msra.mxu0 0
  %240 = vmatpush.bf16.msra.mxu0 0
  %241 = vmatpush.bf16.msra.mxu0 0
  %242 = vmatpush.bf16.msra.mxu0 0
  %243 = vmatpush.bf16.msra.mxu0 0
  %244 = vmatpush.bf16.msra.mxu0 %v231
  %245 = vmatpush.bf16.msra.mxu0 %v230
  %246 = vmatmul.bf16.gmra.mxu0 %v236
  %v247 = vpop.f32.mrf.mxu0
  %v248 = vadd.f32 %v220, %v247
  %v249 = vpop.f32.mrf.mxu0
  %v250 = vadd.f32 %v220, %v249
  %251 = vdwg.mxu0
  %v252 = vlaneseq
  %v253 = vshrl.u32 %v252, 7
  %v254 = vlaneseq
  %v255 = vand.u32 %v254, 127
  %v256 = vmul.u32 %v253, 9
  %v257 = vsub.s32 %v255, %v256
  %vm258 = vcmp.ge.s32.totalorder %v257, 0
  %vm259 = vcmp.lt.s32.totalorder %v257, 9
  %vm260 = vmand %vm258, %vm259
  %v261 = vsel %vm260, 1, 0
  %v262 = vcvt.s32.f32 %v261
  %v265 = vrot.slane %v248, 1
  %v266 = vrot.slane %v248, 2
  %v267 = vrot.slane %v248, 3
  %v268 = vrot.slane %v248, 4
  %v269 = vrot.slane %v248, 5
  %v270 = vrot.slane %v248, 6
  %v271 = vrot.slane %v248, 7
  %v272 = vrot.slane %v250, 1
  %v273 = vrot.slane %v250, 2
  %v274 = vrot.slane %v250, 3
  %v275 = vrot.slane %v250, 4
  %v276 = vrot.slane %v250, 5
  %v277 = vrot.slane %v250, 6
  %v278 = vrot.slane %v250, 7
  %vm279 = vcmp.eq.s32.totalorder %v261, 1
  %v280 = vperm.slane %v248, 0
  %v281 = vperm.slane %v265, 0
  %v282 = vperm.slane %v266, 0
  %v283 = vperm.slane %v267, 0
  %v284 = vperm.slane %v268, 0
  %v285 = vperm.slane %v269, 0
  %v286 = vperm.slane %v270, 0
  %v287 = vperm.slane %v271, 0
  %v288 = vperm.slane %v250, 0
  %v289 = vperm.slane %v272, 0
  %v290 = vperm.slane %v273, 0
  %v291 = vperm.slane %v274, 0
  %v292 = vperm.slane %v275, 0
  %v293 = vperm.slane %v276, 0
  %v294 = vperm.slane %v277, 0
  %v295 = vperm.slane %v278, 0
  %v312 = vsel %vm279, %v280, -inf
  %v313 = vsel %vm279, %v281, -inf
  %v314 = vsel %vm279, %v282, -inf
  %v315 = vsel %vm279, %v283, -inf
  %v316 = vsel %vm279, %v284, -inf
  %v317 = vsel %vm279, %v285, -inf
  %v318 = vsel %vm279, %v286, -inf
  %v319 = vsel %vm279, %v287, -inf
  %v320 = vsel %vm279, %v288, -inf
  %v321 = vsel %vm279, %v289, -inf
  %v322 = vsel %vm279, %v290, -inf
  %v323 = vsel %vm279, %v291, -inf
  %v324 = vsel %vm279, %v292, -inf
  %v325 = vsel %vm279, %v293, -inf
  %v326 = vsel %vm279, %v294, -inf
  %v327 = vsel %vm279, %v295, -inf
  %vm328 = vcmask 289792
  %v329 = vsel %vm328, %v312, -inf
  %330 = vmax.xlane.f32.xlu0 %v329
  %v331 = vpop.xlane.xlu0 %330
  %v332 = vsel %vm328, %v313, -inf
  %333 = vmax.xlane.f32.xlu0 %v332
  %v334 = vpop.xlane.xlu0 %333
  %v335 = vsel %vm328, %v314, -inf
  %336 = vmax.xlane.f32.xlu0 %v335
  %v337 = vpop.xlane.xlu0 %336
  %v338 = vsel %vm328, %v315, -inf
  %339 = vmax.xlane.f32.xlu0 %v338
  %v340 = vpop.xlane.xlu0 %339
  %v341 = vsel %vm328, %v316, -inf
  %342 = vmax.xlane.f32.xlu0 %v341
  %v343 = vpop.xlane.xlu0 %342
  %v344 = vsel %vm328, %v317, -inf
  %345 = vmax.xlane.f32.xlu0 %v344
  %v346 = vpop.xlane.xlu0 %345
  %v347 = vsel %vm328, %v318, -inf
  %348 = vmax.xlane.f32.xlu0 %v347
  %v349 = vpop.xlane.xlu0 %348
  %v350 = vsel %vm328, %v319, -inf
  %351 = vmax.xlane.f32.xlu0 %v350
  %v352 = vpop.xlane.xlu0 %351
  %v353 = vsel %vm328, %v320, -inf
  %354 = vmax.xlane.f32.xlu0 %v353
  %v355 = vpop.xlane.xlu0 %354
  %v356 = vsel %vm328, %v321, -inf
  %357 = vmax.xlane.f32.xlu0 %v356
  %v358 = vpop.xlane.xlu0 %357
  %v359 = vsel %vm328, %v322, -inf
  %360 = vmax.xlane.f32.xlu0 %v359
  %v361 = vpop.xlane.xlu0 %360
  %v362 = vsel %vm328, %v323, -inf
  %363 = vmax.xlane.f32.xlu0 %v362
  %v364 = vpop.xlane.xlu0 %363
  %v365 = vsel %vm328, %v324, -inf
  %366 = vmax.xlane.f32.xlu0 %v365
  %v367 = vpop.xlane.xlu0 %366
  %v368 = vsel %vm328, %v325, -inf
  %369 = vmax.xlane.f32.xlu0 %v368
  %v370 = vpop.xlane.xlu0 %369
  %v371 = vsel %vm328, %v326, -inf
  %372 = vmax.xlane.f32.xlu0 %v371
  %v373 = vpop.xlane.xlu0 %372
  %v374 = vsel %vm328, %v327, -inf
  %375 = vmax.xlane.f32.xlu0 %v374
  %v376 = vpop.xlane.xlu0 %375
  %v393 = vperm.slane %v331, %v255
  %v394 = vperm.slane %v334, %v255
  %v395 = vperm.slane %v337, %v255
  %v396 = vperm.slane %v340, %v255
  %v397 = vperm.slane %v343, %v255
  %v398 = vperm.slane %v346, %v255
  %v399 = vperm.slane %v349, %v255
  %v400 = vperm.slane %v352, %v255
  %v401 = vperm.slane %v355, %v255
  %v402 = vperm.slane %v358, %v255
  %v403 = vperm.slane %v361, %v255
  %v404 = vperm.slane %v364, %v255
  %v405 = vperm.slane %v367, %v255
  %v406 = vperm.slane %v370, %v255
  %v407 = vperm.slane %v373, %v255
  %v408 = vperm.slane %v376, %v255
  %vm409 = vcmask 1041409
  %v410 = vsel %vm409, %v394, %v393
  %vm411 = vcmask 1042434
  %v412 = vsel %vm411, %v395, %v410
  %vm413 = vcmask 1043459
  %v414 = vsel %vm413, %v396, %v412
  %vm415 = vcmask 1044484
  %v416 = vsel %vm415, %v397, %v414
  %vm417 = vcmask 1045509
  %v418 = vsel %vm417, %v398, %v416
  %vm419 = vcmask 1046534
  %v420 = vsel %vm419, %v399, %v418
  %vm421 = vcmask 1047559
  %v422 = vsel %vm421, %v400, %v420
  %v423 = vsel %vm409, %v402, %v401
  %v424 = vsel %vm411, %v403, %v423
  %v425 = vsel %vm413, %v404, %v424
  %v426 = vsel %vm415, %v405, %v425
  %v427 = vsel %vm417, %v406, %v426
  %v428 = vsel %vm419, %v407, %v427
  %v429 = vsel %vm421, %v408, %v428
  %vm430 = vcmask 31744
  %v431 = vsel %vm430, %v422, 0
  %v433 = vsel %vm430, %v429, 0
  %vm435 = vcmask 1043456
  %v437 = vsel %vm435, %v262, 0
  %439 = vmatpush.msra.mxu0 0.0
  %440 = vmatpush.msra.mxu0 0.0
  %441 = vmatpush.msra.mxu0 0.0
  %442 = vmatpush.msra.mxu0 0.0
  %443 = vmatpush.msra.mxu0 0.0
  %444 = vmatpush.msra.mxu0 0.0
  %445 = vmatpush.msra.mxu0 0.0
  %446 = vmatpush.msra.mxu0 0.0
  %447 = vmatpush.msra.mxu0 0.0
  %448 = vmatpush.msra.mxu0 0.0
  %449 = vmatpush.msra.mxu0 0.0
  %450 = vmatpush.msra.mxu0 0.0
  %451 = vmatpush.msra.mxu0 0.0
  %452 = vmatpush.msra.mxu0 0.0
  %453 = vmatpush.msra.mxu0 0.0
  %454 = vmatpush.msra.mxu0 %v437
  %455 = vmatmul.f32.gmra.mxu0 %v431
  %v456 = vpop.f32.mrf.mxu0
  %v457 = vadd.f32 0.0, %v456
  %458 = vmatmul.f32.gmra.mxu0 %v433
  %v459 = vpop.f32.mrf.mxu0
  %v460 = vadd.f32 0.0, %v459
  %461 = vdwg.mxu0
  %v462 = vsub.f32 %v248, %v457
  %v463 = vsub.f32 %v250, %v460
  %v464 = vmul.f32 %v462, 1.442695
  %v465 = vpow.pop %v464
  %v466 = vmul.f32 %v463, 1.442695
  %v467 = vpow.pop %v466
  %v470 = vrot.slane %v465, 1
  %v471 = vrot.slane %v465, 2
  %v472 = vrot.slane %v465, 3
  %v473 = vrot.slane %v465, 4
  %v474 = vrot.slane %v465, 5
  %v475 = vrot.slane %v465, 6
  %v476 = vrot.slane %v465, 7
  %v477 = vrot.slane %v467, 1
  %v478 = vrot.slane %v467, 2
  %v479 = vrot.slane %v467, 3
  %v480 = vrot.slane %v467, 4
  %v481 = vrot.slane %v467, 5
  %v482 = vrot.slane %v467, 6
  %v483 = vrot.slane %v467, 7
  %v484 = vperm.slane %v465, 0
  %v485 = vperm.slane %v470, 0
  %v486 = vperm.slane %v471, 0
  %v487 = vperm.slane %v472, 0
  %v488 = vperm.slane %v473, 0
  %v489 = vperm.slane %v474, 0
  %v490 = vperm.slane %v475, 0
  %v491 = vperm.slane %v476, 0
  %v492 = vperm.slane %v467, 0
  %v493 = vperm.slane %v477, 0
  %v494 = vperm.slane %v478, 0
  %v495 = vperm.slane %v479, 0
  %v496 = vperm.slane %v480, 0
  %v497 = vperm.slane %v481, 0
  %v498 = vperm.slane %v482, 0
  %v499 = vperm.slane %v483, 0
  %v516 = vsel %vm279, %v484, 0.0
  %v517 = vsel %vm279, %v485, 0.0
  %v518 = vsel %vm279, %v486, 0.0
  %v519 = vsel %vm279, %v487, 0.0
  %v520 = vsel %vm279, %v488, 0.0
  %v521 = vsel %vm279, %v489, 0.0
  %v522 = vsel %vm279, %v490, 0.0
  %v523 = vsel %vm279, %v491, 0.0
  %v524 = vsel %vm279, %v492, 0.0
  %v525 = vsel %vm279, %v493, 0.0
  %v526 = vsel %vm279, %v494, 0.0
  %v527 = vsel %vm279, %v495, 0.0
  %v528 = vsel %vm279, %v496, 0.0
  %v529 = vsel %vm279, %v497, 0.0
  %v530 = vsel %vm279, %v498, 0.0
  %v531 = vsel %vm279, %v499, 0.0
  %v532 = vsel %vm328, %v516, 0.0
  %533 = vadd.xlane.f32.xlu0 %v532
  %v534 = vpop.xlane.xlu0 %533
  %v535 = vsel %vm328, %v517, 0.0
  %536 = vadd.xlane.f32.xlu0 %v535
  %v537 = vpop.xlane.xlu0 %536
  %v538 = vsel %vm328, %v518, 0.0
  %539 = vadd.xlane.f32.xlu0 %v538
  %v540 = vpop.xlane.xlu0 %539
  %v541 = vsel %vm328, %v519, 0.0
  %542 = vadd.xlane.f32.xlu0 %v541
  %v543 = vpop.xlane.xlu0 %542
  %v544 = vsel %vm328, %v520, 0.0
  %545 = vadd.xlane.f32.xlu0 %v544
  %v546 = vpop.xlane.xlu0 %545
  %v547 = vsel %vm328, %v521, 0.0
  %548 = vadd.xlane.f32.xlu0 %v547
  %v549 = vpop.xlane.xlu0 %548
  %v550 = vsel %vm328, %v522, 0.0
  %551 = vadd.xlane.f32.xlu0 %v550
  %v552 = vpop.xlane.xlu0 %551
  %v553 = vsel %vm328, %v523, 0.0
  %554 = vadd.xlane.f32.xlu0 %v553
  %v555 = vpop.xlane.xlu0 %554
  %v556 = vsel %vm328, %v524, 0.0
  %557 = vadd.xlane.f32.xlu0 %v556
  %v558 = vpop.xlane.xlu0 %557
  %v559 = vsel %vm328, %v525, 0.0
  %560 = vadd.xlane.f32.xlu0 %v559
  %v561 = vpop.xlane.xlu0 %560
  %v562 = vsel %vm328, %v526, 0.0
  %563 = vadd.xlane.f32.xlu0 %v562
  %v564 = vpop.xlane.xlu0 %563
  %v565 = vsel %vm328, %v527, 0.0
  %566 = vadd.xlane.f32.xlu0 %v565
  %v567 = vpop.xlane.xlu0 %566
  %v568 = vsel %vm328, %v528, 0.0
  %569 = vadd.xlane.f32.xlu0 %v568
  %v570 = vpop.xlane.xlu0 %569
  %v571 = vsel %vm328, %v529, 0.0
  %572 = vadd.xlane.f32.xlu0 %v571
  %v573 = vpop.xlane.xlu0 %572
  %v574 = vsel %vm328, %v530, 0.0
  %575 = vadd.xlane.f32.xlu0 %v574
  %v576 = vpop.xlane.xlu0 %575
  %v577 = vsel %vm328, %v531, 0.0
  %578 = vadd.xlane.f32.xlu0 %v577
  %v579 = vpop.xlane.xlu0 %578
  %v596 = vperm.slane %v534, %v255
  %v597 = vperm.slane %v537, %v255
  %v598 = vperm.slane %v540, %v255
  %v599 = vperm.slane %v543, %v255
  %v600 = vperm.slane %v546, %v255
  %v601 = vperm.slane %v549, %v255
  %v602 = vperm.slane %v552, %v255
  %v603 = vperm.slane %v555, %v255
  %v604 = vperm.slane %v558, %v255
  %v605 = vperm.slane %v561, %v255
  %v606 = vperm.slane %v564, %v255
  %v607 = vperm.slane %v567, %v255
  %v608 = vperm.slane %v570, %v255
  %v609 = vperm.slane %v573, %v255
  %v610 = vperm.slane %v576, %v255
  %v611 = vperm.slane %v579, %v255
  %v612 = vsel %vm409, %v597, %v596
  %v613 = vsel %vm411, %v598, %v612
  %v614 = vsel %vm413, %v599, %v613
  %v615 = vsel %vm415, %v600, %v614
  %v616 = vsel %vm417, %v601, %v615
  %v617 = vsel %vm419, %v602, %v616
  %v618 = vsel %vm421, %v603, %v617
  %v619 = vsel %vm409, %v605, %v604
  %v620 = vsel %vm411, %v606, %v619
  %v621 = vsel %vm413, %v607, %v620
  %v622 = vsel %vm415, %v608, %v621
  %v623 = vsel %vm417, %v609, %v622
  %v624 = vsel %vm419, %v610, %v623
  %v625 = vsel %vm421, %v611, %v624
  %v626 = vsel %vm430, %v618, 0
  %v628 = vsel %vm430, %v625, 0
  %630 = vmatpush.msra.mxu0 0.0
  %631 = vmatpush.msra.mxu0 0.0
  %632 = vmatpush.msra.mxu0 0.0
  %633 = vmatpush.msra.mxu0 0.0
  %634 = vmatpush.msra.mxu0 0.0
  %635 = vmatpush.msra.mxu0 0.0
  %636 = vmatpush.msra.mxu0 0.0
  %637 = vmatpush.msra.mxu0 0.0
  %638 = vmatpush.msra.mxu0 0.0
  %639 = vmatpush.msra.mxu0 0.0
  %640 = vmatpush.msra.mxu0 0.0
  %641 = vmatpush.msra.mxu0 0.0
  %642 = vmatpush.msra.mxu0 0.0
  %643 = vmatpush.msra.mxu0 0.0
  %644 = vmatpush.msra.mxu0 0.0
  %645 = vmatpush.msra.mxu0 %v437
  %646 = vmatmul.f32.gmra.mxu0 %v626
  %v647 = vpop.f32.mrf.mxu0
  %v648 = vadd.f32 0.0, %v647
  %649 = vmatmul.f32.gmra.mxu0 %v628
  %v650 = vpop.f32.mrf.mxu0
  %v651 = vadd.f32 0.0, %v650
  %652 = vdwg.mxu0
  %v653 = vlog2.pop %v648
  %v654 = vmul.f32 %v653, 0.6931472
  %v655 = vlog2.pop %v651
  %v656 = vmul.f32 %v655, 0.6931472
  %v657 = vsub.f32 %v462, %v654
  %v658 = vsub.f32 %v463, %v656
  %v659 = vrcp.pop %v648
  %v660 = vmul.f32 %v648, %v659
  %v661 = vsub.f32 1.0, %v660
  %v662 = vmul.f32 %v659, %v661
  %v663 = vadd.f32 %v659, %v662
  %vm664 = vweird.f32 %v648
  %vm665 = vweird.f32 %v659
  %vm666 = vmor %vm664, %vm665
  %v667 = vsel %vm666, %v659, %v663
  %v668 = vand.u32 2147483647, %v648
  %vm669 = vcmp.eq.f32.partialorder %v668, 8.507059e+37
  %v670 = vand.u32 %v648, 2147483648
  %v671 = vor.u32 1.1754944e-38, %v670
  %v672 = vsel %vm669, %v671, %v667
  %v673 = vmul.f32 %v465, %v672
  %v674 = vrcp.pop %v651
  %v675 = vmul.f32 %v651, %v674
  %v676 = vsub.f32 1.0, %v675
  %v677 = vmul.f32 %v674, %v676
  %v678 = vadd.f32 %v674, %v677
  %vm679 = vweird.f32 %v651
  %vm680 = vweird.f32 %v674
  %vm681 = vmor %vm679, %vm680
  %v682 = vsel %vm681, %v674, %v678
  %v683 = vand.u32 2147483647, %v651
  %vm684 = vcmp.eq.f32.partialorder %v683, 8.507059e+37
  %v685 = vand.u32 %v651, 2147483648
  %v686 = vor.u32 1.1754944e-38, %v685
  %v687 = vsel %vm684, %v686, %v682
  %v688 = vmul.f32 %v467, %v687
  %v689 = vxor.u32 %v122, 2147483648
  %v690 = vxor.u32 %v124, 2147483648
  %v691 = vmul.f32 %v689, 1.442695
  %v692 = vpow.pop %v691
  %v693 = vmul.f32 %v690, 1.442695
  %v694 = vpow.pop %v693
  %v695 = vadd.f32 %v692, 1.0
  %v696 = vadd.f32 %v694, 1.0
  %v697 = vrcp.pop %v695
  %v698 = vmul.f32 %v695, %v697
  %v699 = vsub.f32 1.0, %v698
  %v700 = vmul.f32 %v697, %v699
  %v701 = vadd.f32 %v697, %v700
  %vm702 = vweird.f32 %v695
  %vm703 = vweird.f32 %v697
  %vm704 = vmor %vm702, %vm703
  %v705 = vsel %vm704, %v697, %v701
  %v706 = vand.u32 2147483647, %v695
  %vm707 = vcmp.eq.f32.partialorder %v706, 8.507059e+37
  %v708 = vand.u32 %v695, 2147483648
  %v709 = vor.u32 1.1754944e-38, %v708
  %v710 = vsel %vm707, %v709, %v705
  %v711 = vmul.f32 1.0, %v710
  %v712 = vrcp.pop %v696
  %v713 = vmul.f32 %v696, %v712
  %v714 = vsub.f32 1.0, %v713
  %v715 = vmul.f32 %v712, %v714
  %v716 = vadd.f32 %v712, %v715
  %vm717 = vweird.f32 %v696
  %vm718 = vweird.f32 %v712
  %vm719 = vmor %vm717, %vm718
  %v720 = vsel %vm719, %v712, %v716
  %v721 = vand.u32 2147483647, %v696
  %vm722 = vcmp.eq.f32.partialorder %v721, 8.507059e+37
  %v723 = vand.u32 %v696, 2147483648
  %v724 = vor.u32 1.1754944e-38, %v723
  %v725 = vsel %vm722, %v724, %v720
  %v726 = vmul.f32 1.0, %v725
  %v727 = vmul.f32 %v711, 0.7853982
  %v728 = vmul.f32 %v726, 0.7853982
  %v729 = vcvt.s32.f32 %v257
  %v732 = vrot.slane %v673, 1
  %v733 = vrot.slane %v673, 2
  %v734 = vrot.slane %v673, 3
  %v735 = vrot.slane %v673, 4
  %v736 = vrot.slane %v673, 5
  %v737 = vrot.slane %v673, 6
  %v738 = vrot.slane %v673, 7
  %v739 = vrot.slane %v688, 1
  %v740 = vrot.slane %v688, 2
  %v741 = vrot.slane %v688, 3
  %v742 = vrot.slane %v688, 4
  %v743 = vrot.slane %v688, 5
  %v744 = vrot.slane %v688, 6
  %v745 = vrot.slane %v688, 7
  %v746 = vperm.slane %v673, 0
  %v747 = vperm.slane %v732, 0
  %v748 = vperm.slane %v733, 0
  %v749 = vperm.slane %v734, 0
  %v750 = vperm.slane %v735, 0
  %v751 = vperm.slane %v736, 0
  %v752 = vperm.slane %v737, 0
  %v753 = vperm.slane %v738, 0
  %v754 = vperm.slane %v688, 0
  %v755 = vperm.slane %v739, 0
  %v756 = vperm.slane %v740, 0
  %v757 = vperm.slane %v741, 0
  %v758 = vperm.slane %v742, 0
  %v759 = vperm.slane %v743, 0
  %v760 = vperm.slane %v744, 0
  %v761 = vperm.slane %v745, 0
  %v778 = vsel %vm279, %v746, -1.0
  %v779 = vsel %vm279, %v747, -1.0
  %v780 = vsel %vm279, %v748, -1.0
  %v781 = vsel %vm279, %v749, -1.0
  %v782 = vsel %vm279, %v750, -1.0
  %v783 = vsel %vm279, %v751, -1.0
  %v784 = vsel %vm279, %v752, -1.0
  %v785 = vsel %vm279, %v753, -1.0
  %v786 = vsel %vm279, %v754, -1.0
  %v787 = vsel %vm279, %v755, -1.0
  %v788 = vsel %vm279, %v756, -1.0
  %v789 = vsel %vm279, %v757, -1.0
  %v790 = vsel %vm279, %v758, -1.0
  %v791 = vsel %vm279, %v759, -1.0
  %v792 = vsel %vm279, %v760, -1.0
  %v793 = vsel %vm279, %v761, -1.0
  %v794 = vsel %vm328, %v778, -inf
  %795 = vmax.xlane.f32.xlu0 %v794
  %v796 = vpop.xlane.xlu0 %795
  %v797 = vsel %vm328, %v779, -inf
  %798 = vmax.xlane.f32.xlu0 %v797
  %v799 = vpop.xlane.xlu0 %798
  %v800 = vsel %vm328, %v780, -inf
  %801 = vmax.xlane.f32.xlu0 %v800
  %v802 = vpop.xlane.xlu0 %801
  %v803 = vsel %vm328, %v781, -inf
  %804 = vmax.xlane.f32.xlu0 %v803
  %v805 = vpop.xlane.xlu0 %804
  %v806 = vsel %vm328, %v782, -inf
  %807 = vmax.xlane.f32.xlu0 %v806
  %v808 = vpop.xlane.xlu0 %807
  %v809 = vsel %vm328, %v783, -inf
  %810 = vmax.xlane.f32.xlu0 %v809
  %v811 = vpop.xlane.xlu0 %810
  %v812 = vsel %vm328, %v784, -inf
  %813 = vmax.xlane.f32.xlu0 %v812
  %v814 = vpop.xlane.xlu0 %813
  %v815 = vsel %vm328, %v785, -inf
  %816 = vmax.xlane.f32.xlu0 %v815
  %v817 = vpop.xlane.xlu0 %816
  %v818 = vsel %vm328, %v786, -inf
  %819 = vmax.xlane.f32.xlu0 %v818
  %v820 = vpop.xlane.xlu0 %819
  %v821 = vsel %vm328, %v787, -inf
  %822 = vmax.xlane.f32.xlu0 %v821
  %v823 = vpop.xlane.xlu0 %822
  %v824 = vsel %vm328, %v788, -inf
  %825 = vmax.xlane.f32.xlu0 %v824
  %v826 = vpop.xlane.xlu0 %825
  %v827 = vsel %vm328, %v789, -inf
  %828 = vmax.xlane.f32.xlu0 %v827
  %v829 = vpop.xlane.xlu0 %828
  %v830 = vsel %vm328, %v790, -inf
  %831 = vmax.xlane.f32.xlu0 %v830
  %v832 = vpop.xlane.xlu0 %831
  %v833 = vsel %vm328, %v791, -inf
  %834 = vmax.xlane.f32.xlu0 %v833
  %v835 = vpop.xlane.xlu0 %834
  %v836 = vsel %vm328, %v792, -inf
  %837 = vmax.xlane.f32.xlu0 %v836
  %v838 = vpop.xlane.xlu0 %837
  %v839 = vsel %vm328, %v793, -inf
  %840 = vmax.xlane.f32.xlu0 %v839
  %v841 = vpop.xlane.xlu0 %840
  %vm842 = vcmp.eq.f32.partialorder %v778, %v796
  %vm843 = vcmp.eq.f32.partialorder %v779, %v799
  %vm844 = vcmp.eq.f32.partialorder %v780, %v802
  %vm845 = vcmp.eq.f32.partialorder %v781, %v805
  %vm846 = vcmp.eq.f32.partialorder %v782, %v808
  %vm847 = vcmp.eq.f32.partialorder %v783, %v811
  %vm848 = vcmp.eq.f32.partialorder %v784, %v814
  %vm849 = vcmp.eq.f32.partialorder %v785, %v817
  %vm850 = vcmp.eq.f32.partialorder %v786, %v820
  %vm851 = vcmp.eq.f32.partialorder %v787, %v823
  %vm852 = vcmp.eq.f32.partialorder %v788, %v826
  %vm853 = vcmp.eq.f32.partialorder %v789, %v829
  %vm854 = vcmp.eq.f32.partialorder %v790, %v832
  %vm855 = vcmp.eq.f32.partialorder %v791, %v835
  %vm856 = vcmp.eq.f32.partialorder %v792, %v838
  %vm857 = vcmp.eq.f32.partialorder %v793, %v841
  %vm858 = vmand %vm279, %vm842
  %vm859 = vmand %vm279, %vm843
  %vm860 = vmand %vm279, %vm844
  %vm861 = vmand %vm279, %vm845
  %vm862 = vmand %vm279, %vm846
  %vm863 = vmand %vm279, %vm847
  %vm864 = vmand %vm279, %vm848
  %vm865 = vmand %vm279, %vm849
  %vm866 = vmand %vm279, %vm850
  %vm867 = vmand %vm279, %vm851
  %vm868 = vmand %vm279, %vm852
  %vm869 = vmand %vm279, %vm853
  %vm870 = vmand %vm279, %vm854
  %vm871 = vmand %vm279, %vm855
  %vm872 = vmand %vm279, %vm856
  %vm873 = vmand %vm279, %vm857
  %v874 = vsel %vm858, %v729, 9.0
  %v875 = vsel %vm859, %v729, 9.0
  %v876 = vsel %vm860, %v729, 9.0
  %v877 = vsel %vm861, %v729, 9.0
  %v878 = vsel %vm862, %v729, 9.0
  %v879 = vsel %vm863, %v729, 9.0
  %v880 = vsel %vm864, %v729, 9.0
  %v881 = vsel %vm865, %v729, 9.0
  %v882 = vsel %vm866, %v729, 9.0
  %v883 = vsel %vm867, %v729, 9.0
  %v884 = vsel %vm868, %v729, 9.0
  %v885 = vsel %vm869, %v729, 9.0
  %v886 = vsel %vm870, %v729, 9.0
  %v887 = vsel %vm871, %v729, 9.0
  %v888 = vsel %vm872, %v729, 9.0
  %v889 = vsel %vm873, %v729, 9.0
  %v890 = vsel %vm328, %v874, inf
  %891 = vmin.xlane.f32.xlu0 %v890
  %v892 = vpop.xlane.xlu0 %891
  %v893 = vsel %vm328, %v875, inf
  %894 = vmin.xlane.f32.xlu0 %v893
  %v895 = vpop.xlane.xlu0 %894
  %v896 = vsel %vm328, %v876, inf
  %897 = vmin.xlane.f32.xlu0 %v896
  %v898 = vpop.xlane.xlu0 %897
  %v899 = vsel %vm328, %v877, inf
  %900 = vmin.xlane.f32.xlu0 %v899
  %v901 = vpop.xlane.xlu0 %900
  %v902 = vsel %vm328, %v878, inf
  %903 = vmin.xlane.f32.xlu0 %v902
  %v904 = vpop.xlane.xlu0 %903
  %v905 = vsel %vm328, %v879, inf
  %906 = vmin.xlane.f32.xlu0 %v905
  %v907 = vpop.xlane.xlu0 %906
  %v908 = vsel %vm328, %v880, inf
  %909 = vmin.xlane.f32.xlu0 %v908
  %v910 = vpop.xlane.xlu0 %909
  %v911 = vsel %vm328, %v881, inf
  %912 = vmin.xlane.f32.xlu0 %v911
  %v913 = vpop.xlane.xlu0 %912
  %v914 = vsel %vm328, %v882, inf
  %915 = vmin.xlane.f32.xlu0 %v914
  %v916 = vpop.xlane.xlu0 %915
  %v917 = vsel %vm328, %v883, inf
  %918 = vmin.xlane.f32.xlu0 %v917
  %v919 = vpop.xlane.xlu0 %918
  %v920 = vsel %vm328, %v884, inf
  %921 = vmin.xlane.f32.xlu0 %v920
  %v922 = vpop.xlane.xlu0 %921
  %v923 = vsel %vm328, %v885, inf
  %924 = vmin.xlane.f32.xlu0 %v923
  %v925 = vpop.xlane.xlu0 %924
  %v926 = vsel %vm328, %v886, inf
  %927 = vmin.xlane.f32.xlu0 %v926
  %v928 = vpop.xlane.xlu0 %927
  %v929 = vsel %vm328, %v887, inf
  %930 = vmin.xlane.f32.xlu0 %v929
  %v931 = vpop.xlane.xlu0 %930
  %v932 = vsel %vm328, %v888, inf
  %933 = vmin.xlane.f32.xlu0 %v932
  %v934 = vpop.xlane.xlu0 %933
  %v935 = vsel %vm328, %v889, inf
  %936 = vmin.xlane.f32.xlu0 %v935
  %v937 = vpop.xlane.xlu0 %936
  %vm938 = vcmp.lt.s32.totalorder %v257, 8
  %v939 = vmul.f32 %v729, 0.7853982
  %v940 = vsub.f32 %v939, 3.1415927
  %v941 = vsel %vm938, %v940, 0.0
  %vm942 = vcmp.eq.f32.partialorder %v729, %v892
  %vm943 = vcmp.eq.f32.partialorder %v729, %v895
  %vm944 = vcmp.eq.f32.partialorder %v729, %v898
  %vm945 = vcmp.eq.f32.partialorder %v729, %v901
  %vm946 = vcmp.eq.f32.partialorder %v729, %v904
  %vm947 = vcmp.eq.f32.partialorder %v729, %v907
  %vm948 = vcmp.eq.f32.partialorder %v729, %v910
  %vm949 = vcmp.eq.f32.partialorder %v729, %v913
  %vm950 = vcmp.eq.f32.partialorder %v729, %v916
  %vm951 = vcmp.eq.f32.partialorder %v729, %v919
  %vm952 = vcmp.eq.f32.partialorder %v729, %v922
  %vm953 = vcmp.eq.f32.partialorder %v729, %v925
  %vm954 = vcmp.eq.f32.partialorder %v729, %v928
  %vm955 = vcmp.eq.f32.partialorder %v729, %v931
  %vm956 = vcmp.eq.f32.partialorder %v729, %v934
  %vm957 = vcmp.eq.f32.partialorder %v729, %v937
  %vm958 = vmand %vm279, %vm942
  %vm959 = vmand %vm279, %vm943
  %vm960 = vmand %vm279, %vm944
  %vm961 = vmand %vm279, %vm945
  %vm962 = vmand %vm279, %vm946
  %vm963 = vmand %vm279, %vm947
  %vm964 = vmand %vm279, %vm948
  %vm965 = vmand %vm279, %vm949
  %vm966 = vmand %vm279, %vm950
  %vm967 = vmand %vm279, %vm951
  %vm968 = vmand %vm279, %vm952
  %vm969 = vmand %vm279, %vm953
  %vm970 = vmand %vm279, %vm954
  %vm971 = vmand %vm279, %vm955
  %vm972 = vmand %vm279, %vm956
  %vm973 = vmand %vm279, %vm957
  %v974 = vsel %vm958, %v941, 0.0
  %v975 = vsel %vm959, %v941, 0.0
  %v976 = vsel %vm960, %v941, 0.0
  %v977 = vsel %vm961, %v941, 0.0
  %v978 = vsel %vm962, %v941, 0.0
  %v979 = vsel %vm963, %v941, 0.0
  %v980 = vsel %vm964, %v941, 0.0
  %v981 = vsel %vm965, %v941, 0.0
  %v982 = vsel %vm966, %v941, 0.0
  %v983 = vsel %vm967, %v941, 0.0
  %v984 = vsel %vm968, %v941, 0.0
  %v985 = vsel %vm969, %v941, 0.0
  %v986 = vsel %vm970, %v941, 0.0
  %v987 = vsel %vm971, %v941, 0.0
  %v988 = vsel %vm972, %v941, 0.0
  %v989 = vsel %vm973, %v941, 0.0
  %v990 = vsel %vm328, %v974, 0.0
  %991 = vadd.xlane.f32.xlu0 %v990
  %v992 = vpop.xlane.xlu0 %991
  %v993 = vsel %vm328, %v975, 0.0
  %994 = vadd.xlane.f32.xlu0 %v993
  %v995 = vpop.xlane.xlu0 %994
  %v996 = vsel %vm328, %v976, 0.0
  %997 = vadd.xlane.f32.xlu0 %v996
  %v998 = vpop.xlane.xlu0 %997
  %v999 = vsel %vm328, %v977, 0.0
  %1000 = vadd.xlane.f32.xlu0 %v999
  %v1001 = vpop.xlane.xlu0 %1000
  %v1002 = vsel %vm328, %v978, 0.0
  %1003 = vadd.xlane.f32.xlu0 %v1002
  %v1004 = vpop.xlane.xlu0 %1003
  %v1005 = vsel %vm328, %v979, 0.0
  %1006 = vadd.xlane.f32.xlu0 %v1005
  %v1007 = vpop.xlane.xlu0 %1006
  %v1008 = vsel %vm328, %v980, 0.0
  %1009 = vadd.xlane.f32.xlu0 %v1008
  %v1010 = vpop.xlane.xlu0 %1009
  %v1011 = vsel %vm328, %v981, 0.0
  %1012 = vadd.xlane.f32.xlu0 %v1011
  %v1013 = vpop.xlane.xlu0 %1012
  %v1014 = vsel %vm328, %v982, 0.0
  %1015 = vadd.xlane.f32.xlu0 %v1014
  %v1016 = vpop.xlane.xlu0 %1015
  %v1017 = vsel %vm328, %v983, 0.0
  %1018 = vadd.xlane.f32.xlu0 %v1017
  %v1019 = vpop.xlane.xlu0 %1018
  %v1020 = vsel %vm328, %v984, 0.0
  %1021 = vadd.xlane.f32.xlu0 %v1020
  %v1022 = vpop.xlane.xlu0 %1021
  %v1023 = vsel %vm328, %v985, 0.0
  %1024 = vadd.xlane.f32.xlu0 %v1023
  %v1025 = vpop.xlane.xlu0 %1024
  %v1026 = vsel %vm328, %v986, 0.0
  %1027 = vadd.xlane.f32.xlu0 %v1026
  %v1028 = vpop.xlane.xlu0 %1027
  %v1029 = vsel %vm328, %v987, 0.0
  %1030 = vadd.xlane.f32.xlu0 %v1029
  %v1031 = vpop.xlane.xlu0 %1030
  %v1032 = vsel %vm328, %v988, 0.0
  %1033 = vadd.xlane.f32.xlu0 %v1032
  %v1034 = vpop.xlane.xlu0 %1033
  %v1035 = vsel %vm328, %v989, 0.0
  %1036 = vadd.xlane.f32.xlu0 %v1035
  %v1037 = vpop.xlane.xlu0 %1036
  %v1040 = vperm.slane %v727, 0
  %v1041 = vlaneseq
  %v1042 = vshrl.u32 %v1041, 7
  %1044 = vset.pattern.permute.xlu0 %v1042
  %1045 = vperm.xlu0 %1044, %v1040
  %v1046 = vpop.permute.xlu0 %1045
  %v1047 = vperm.slane %v727, 1
  %v1048 = vlaneseq
  %v1049 = vshrl.u32 %v1048, 7
  %1051 = vset.pattern.permute.xlu0 %v1049
  %1052 = vperm.xlu0 %1051, %v1047
  %v1053 = vpop.permute.xlu0 %1052
  %v1054 = vperm.slane %v727, 2
  %v1055 = vlaneseq
  %v1056 = vshrl.u32 %v1055, 7
  %1058 = vset.pattern.permute.xlu0 %v1056
  %1059 = vperm.xlu0 %1058, %v1054
  %v1060 = vpop.permute.xlu0 %1059
  %v1061 = vperm.slane %v727, 3
  %v1062 = vlaneseq
  %v1063 = vshrl.u32 %v1062, 7
  %1065 = vset.pattern.permute.xlu0 %v1063
  %1066 = vperm.xlu0 %1065, %v1061
  %v1067 = vpop.permute.xlu0 %1066
  %v1068 = vperm.slane %v727, 4
  %v1069 = vlaneseq
  %v1070 = vshrl.u32 %v1069, 7
  %1072 = vset.pattern.permute.xlu0 %v1070
  %1073 = vperm.xlu0 %1072, %v1068
  %v1074 = vpop.permute.xlu0 %1073
  %v1075 = vperm.slane %v727, 5
  %v1076 = vlaneseq
  %v1077 = vshrl.u32 %v1076, 7
  %1079 = vset.pattern.permute.xlu0 %v1077
  %1080 = vperm.xlu0 %1079, %v1075
  %v1081 = vpop.permute.xlu0 %1080
  %v1082 = vperm.slane %v727, 6
  %v1083 = vlaneseq
  %v1084 = vshrl.u32 %v1083, 7
  %1086 = vset.pattern.permute.xlu0 %v1084
  %1087 = vperm.xlu0 %1086, %v1082
  %v1088 = vpop.permute.xlu0 %1087
  %v1089 = vperm.slane %v727, 7
  %v1090 = vlaneseq
  %v1091 = vshrl.u32 %v1090, 7
  %1093 = vset.pattern.permute.xlu0 %v1091
  %1094 = vperm.xlu0 %1093, %v1089
  %v1095 = vpop.permute.xlu0 %1094
  %v1096 = vperm.slane %v728, 0
  %v1097 = vlaneseq
  %v1098 = vshrl.u32 %v1097, 7
  %1100 = vset.pattern.permute.xlu0 %v1098
  %1101 = vperm.xlu0 %1100, %v1096
  %v1102 = vpop.permute.xlu0 %1101
  %v1103 = vperm.slane %v728, 1
  %v1104 = vlaneseq
  %v1105 = vshrl.u32 %v1104, 7
  %1107 = vset.pattern.permute.xlu0 %v1105
  %1108 = vperm.xlu0 %1107, %v1103
  %v1109 = vpop.permute.xlu0 %1108
  %v1110 = vperm.slane %v728, 2
  %v1111 = vlaneseq
  %v1112 = vshrl.u32 %v1111, 7
  %1114 = vset.pattern.permute.xlu0 %v1112
  %1115 = vperm.xlu0 %1114, %v1110
  %v1116 = vpop.permute.xlu0 %1115
  %v1117 = vperm.slane %v728, 3
  %v1118 = vlaneseq
  %v1119 = vshrl.u32 %v1118, 7
  %1121 = vset.pattern.permute.xlu0 %v1119
  %1122 = vperm.xlu0 %1121, %v1117
  %v1123 = vpop.permute.xlu0 %1122
  %v1124 = vperm.slane %v728, 4
  %v1125 = vlaneseq
  %v1126 = vshrl.u32 %v1125, 7
  %1128 = vset.pattern.permute.xlu0 %v1126
  %1129 = vperm.xlu0 %1128, %v1124
  %v1130 = vpop.permute.xlu0 %1129
  %v1131 = vperm.slane %v728, 5
  %v1132 = vlaneseq
  %v1133 = vshrl.u32 %v1132, 7
  %1135 = vset.pattern.permute.xlu0 %v1133
  %1136 = vperm.xlu0 %1135, %v1131
  %v1137 = vpop.permute.xlu0 %1136
  %v1138 = vperm.slane %v728, 6
  %v1139 = vlaneseq
  %v1140 = vshrl.u32 %v1139, 7
  %1142 = vset.pattern.permute.xlu0 %v1140
  %1143 = vperm.xlu0 %1142, %v1138
  %v1144 = vpop.permute.xlu0 %1143
  %v1145 = vperm.slane %v728, 7
  %v1146 = vlaneseq
  %v1147 = vshrl.u32 %v1146, 7
  %1149 = vset.pattern.permute.xlu0 %v1147
  %1150 = vperm.xlu0 %1149, %v1145
  %v1151 = vpop.permute.xlu0 %1150
  %v1168 = vadd.f32 %v992, %v1046
  %v1169 = vadd.f32 %v995, %v1053
  %v1170 = vadd.f32 %v998, %v1060
  %v1171 = vadd.f32 %v1001, %v1067
  %v1172 = vadd.f32 %v1004, %v1074
  %v1173 = vadd.f32 %v1007, %v1081
  %v1174 = vadd.f32 %v1010, %v1088
  %v1175 = vadd.f32 %v1013, %v1095
  %v1176 = vadd.f32 %v1016, %v1102
  %v1177 = vadd.f32 %v1019, %v1109
  %v1178 = vadd.f32 %v1022, %v1116
  %v1179 = vadd.f32 %v1025, %v1123
  %v1180 = vadd.f32 %v1028, %v1130
  %v1181 = vadd.f32 %v1031, %v1137
  %v1182 = vadd.f32 %v1034, %v1144
  %v1183 = vadd.f32 %v1037, %v1151
  %v1184 = vld [vmem:[%s1] sm:$0xf]
  %v1185 = vld [vmem:[%s1 + $0x4] sm:$0xf]
  %v1186 = vld [vmem:[%s8] sm:$0xf]
  %v1187 = vld [vmem:[%s8 + $0x4] sm:$0xf]
  %v1188 = vld [vmem:[%s8 + $0x8] sm:$0xf]
  %v1189 = vld [vmem:[%s8 + $0xc] sm:$0xf]
  %v1190 = vld [vmem:[%s8 + $0x10] sm:$0xf]
  %v1191 = vld [vmem:[%s8 + $0x14] sm:$0xf]
  %v1192 = vld [vmem:[%s8 + $0x18] sm:$0xf]
  %v1193 = vld [vmem:[%s8 + $0x1c] sm:$0xf]
  %v1194 = vld [vmem:[%s8 + $0x20] sm:$0xf]
  %v1195 = vld [vmem:[%s8 + $0x24] sm:$0xf]
  %v1196 = vld [vmem:[%s8 + $0x28] sm:$0xf]
  %v1197 = vld [vmem:[%s8 + $0x2c] sm:$0xf]
  %v1198 = vld [vmem:[%s8 + $0x30] sm:$0xf]
  %v1199 = vld [vmem:[%s8 + $0x34] sm:$0xf]
  %v1200 = vld [vmem:[%s8 + $0x38] sm:$0xf]
  %v1201 = vld [vmem:[%s8 + $0x3c] sm:$0xf]
  %v1202 = vld [vmem:[%s9] sm:$0x1]
  %v1204 = vperm.slane %v1202, 0
  %v1208 = vunpack.c.l.b16 %v1184
  %v1209 = vunpack.c.l.b16 %v1185
  %v1210 = vpack.c.b16 %v1209, %v1208
  %v1228 = vunpack.c.l.b16 %v1186
  %v1229 = vunpack.c.l.b16 %v1187
  %v1230 = vunpack.c.l.b16 %v1188
  %v1231 = vunpack.c.l.b16 %v1189
  %v1232 = vunpack.c.l.b16 %v1190
  %v1233 = vunpack.c.l.b16 %v1191
  %v1234 = vunpack.c.l.b16 %v1192
  %v1235 = vunpack.c.l.b16 %v1193
  %v1236 = vunpack.c.l.b16 %v1194
  %v1237 = vunpack.c.l.b16 %v1195
  %v1238 = vunpack.c.l.b16 %v1196
  %v1239 = vunpack.c.l.b16 %v1197
  %v1240 = vunpack.c.l.b16 %v1198
  %v1241 = vunpack.c.l.b16 %v1199
  %v1242 = vunpack.c.l.b16 %v1200
  %v1243 = vunpack.c.l.b16 %v1201
  %v1244 = vpack.c.b16 %v1229, %v1228
  %v1245 = vpack.c.b16 %v1231, %v1230
  %v1246 = vpack.c.b16 %v1233, %v1232
  %v1247 = vpack.c.b16 %v1235, %v1234
  %v1248 = vpack.c.b16 %v1237, %v1236
  %v1249 = vpack.c.b16 %v1239, %v1238
  %v1250 = vpack.c.b16 %v1241, %v1240
  %v1251 = vpack.c.b16 %v1243, %v1242
  %1260 = vmatpush.bf16.msra.mxu0 %v1251
  %1261 = vmatpush.bf16.msra.mxu0 %v1250
  %1262 = vmatpush.bf16.msra.mxu0 %v1249
  %1263 = vmatpush.bf16.msra.mxu0 %v1248
  %1264 = vmatpush.bf16.msra.mxu0 %v1247
  %1265 = vmatpush.bf16.msra.mxu0 %v1246
  %1266 = vmatpush.bf16.msra.mxu0 %v1245
  %1267 = vmatpush.bf16.msra.mxu0 %v1244
  %1268 = vmatmul.bf16.gmra.mxu0 %v1210
  %v1269 = vpop.f32.mrf.mxu0
  %v1270 = vadd.f32 %v1204, %v1269
  %v1271 = vpop.f32.mrf.mxu0
  %v1272 = vadd.f32 %v1204, %v1271
  %1273 = vdwg.mxu0
  %vm1274 = vcmp.gt.f32.partialorder %v1270, 0.0
  %vm1275 = vcmp.gt.f32.partialorder %v1272, 0.0
  %v1276 = vmul.f32 %v1270, 0.01
  %v1277 = vmul.f32 %v1272, 0.01
  %v1278 = vsel %vm1274, %v1270, %v1276
  %v1279 = vsel %vm1275, %v1272, %v1277
  %1280 = vst [vmem:[%s10] sm:$0xff] %v122
  %1281 = vst [vmem:[%s10 + $0x38] sm:$0xff] %v124
  %vm1282 = vcmask 293888
  %v1283 = vsel %vm1282, %v248, 0.0
  %v1284 = vsel %vm1282, %v250, 0.0
  %1285 = vst [vmem:[%s10 + $0x8] sm:$0xff] %v1283
  %1286 = vst [vmem:[%s10 + $0x40] sm:$0xff] %v1284
  %v1287 = vsel %vm1282, %v657, 0.0
  %v1288 = vsel %vm1282, %v658, 0.0
  %1289 = vst [vmem:[%s10 + $0x10] sm:$0xff] %v1287
  %1290 = vst [vmem:[%s10 + $0x48] sm:$0xff] %v1288
  %v1291 = vsel %vm1282, %v673, 0.0
  %v1292 = vsel %vm1282, %v688, 0.0
  %1293 = vst [vmem:[%s10 + $0x18] sm:$0xff] %v1291
  %1294 = vst [vmem:[%s10 + $0x50] sm:$0xff] %v1292
  %v1295 = vsel %vm430, %v727, 0.0
  %v1296 = vsel %vm430, %v728, 0.0
  %1297 = vst [vmem:[%s10 + $0x20] sm:$0xff] %v1295
  %1298 = vst [vmem:[%s10 + $0x58] sm:$0xff] %v1296
  %1315 = vset.pattern.permute.xlu0 0
  %1316 = vperm.xlu0 %1315, %v1168
  %v1317 = vpop.permute.xlu0 %1316
  %1318 = vset.pattern.permute.xlu0 0
  %1319 = vperm.xlu0 %1318, %v1169
  %v1320 = vpop.permute.xlu0 %1319
  %1321 = vset.pattern.permute.xlu0 0
  %1322 = vperm.xlu0 %1321, %v1170
  %v1323 = vpop.permute.xlu0 %1322
  %1324 = vset.pattern.permute.xlu0 0
  %1325 = vperm.xlu0 %1324, %v1171
  %v1326 = vpop.permute.xlu0 %1325
  %1327 = vset.pattern.permute.xlu0 0
  %1328 = vperm.xlu0 %1327, %v1172
  %v1329 = vpop.permute.xlu0 %1328
  %1330 = vset.pattern.permute.xlu0 0
  %1331 = vperm.xlu0 %1330, %v1173
  %v1332 = vpop.permute.xlu0 %1331
  %1333 = vset.pattern.permute.xlu0 0
  %1334 = vperm.xlu0 %1333, %v1174
  %v1335 = vpop.permute.xlu0 %1334
  %1336 = vset.pattern.permute.xlu0 0
  %1337 = vperm.xlu0 %1336, %v1175
  %v1338 = vpop.permute.xlu0 %1337
  %1339 = vset.pattern.permute.xlu0 0
  %1340 = vperm.xlu0 %1339, %v1176
  %v1341 = vpop.permute.xlu0 %1340
  %1342 = vset.pattern.permute.xlu0 0
  %1343 = vperm.xlu0 %1342, %v1177
  %v1344 = vpop.permute.xlu0 %1343
  %1345 = vset.pattern.permute.xlu0 0
  %1346 = vperm.xlu0 %1345, %v1178
  %v1347 = vpop.permute.xlu0 %1346
  %1348 = vset.pattern.permute.xlu0 0
  %1349 = vperm.xlu0 %1348, %v1179
  %v1350 = vpop.permute.xlu0 %1349
  %1351 = vset.pattern.permute.xlu0 0
  %1352 = vperm.xlu0 %1351, %v1180
  %v1353 = vpop.permute.xlu0 %1352
  %1354 = vset.pattern.permute.xlu0 0
  %1355 = vperm.xlu0 %1354, %v1181
  %v1356 = vpop.permute.xlu0 %1355
  %1357 = vset.pattern.permute.xlu0 0
  %1358 = vperm.xlu0 %1357, %v1182
  %v1359 = vpop.permute.xlu0 %1358
  %1360 = vset.pattern.permute.xlu0 0
  %1361 = vperm.xlu0 %1360, %v1183
  %v1362 = vpop.permute.xlu0 %1361
  %v1363 = vperm.slane %v1317, %v255
  %v1364 = vperm.slane %v1320, %v255
  %v1365 = vperm.slane %v1323, %v255
  %v1366 = vperm.slane %v1326, %v255
  %v1367 = vperm.slane %v1329, %v255
  %v1368 = vperm.slane %v1332, %v255
  %v1369 = vperm.slane %v1335, %v255
  %v1370 = vperm.slane %v1338, %v255
  %v1371 = vperm.slane %v1341, %v255
  %v1372 = vperm.slane %v1344, %v255
  %v1373 = vperm.slane %v1347, %v255
  %v1374 = vperm.slane %v1350, %v255
  %v1375 = vperm.slane %v1353, %v255
  %v1376 = vperm.slane %v1356, %v255
  %v1377 = vperm.slane %v1359, %v255
  %v1378 = vperm.slane %v1362, %v255
  %v1379 = vsel %vm409, %v1364, %v1363
  %v1380 = vsel %vm411, %v1365, %v1379
  %v1381 = vsel %vm413, %v1366, %v1380
  %v1382 = vsel %vm415, %v1367, %v1381
  %v1383 = vsel %vm417, %v1368, %v1382
  %v1384 = vsel %vm419, %v1369, %v1383
  %v1385 = vsel %vm421, %v1370, %v1384
  %v1386 = vsel %vm409, %v1372, %v1371
  %v1387 = vsel %vm411, %v1373, %v1386
  %v1388 = vsel %vm413, %v1374, %v1387
  %v1389 = vsel %vm415, %v1375, %v1388
  %v1390 = vsel %vm417, %v1376, %v1389
  %v1391 = vsel %vm419, %v1377, %v1390
  %v1392 = vsel %vm421, %v1378, %v1391
  %v1395 = vsel %vm430, %v1385, 0.0
  %v1396 = vsel %vm430, %v1392, 0.0
  %1397 = vst [vmem:[%s10 + $0x28] sm:$0xff] %v1395
  %1398 = vst [vmem:[%s10 + $0x60] sm:$0xff] %v1396
  %v1399 = vsel %vm234, %v1278, 0.0
  %v1400 = vsel %vm234, %v1279, 0.0
  %1401 = vst [vmem:[%s10 + $0x30] sm:$0xff] %v1399
  %1402 = vst [vmem:[%s10 + $0x68] sm:$0xff] %v1400
  // Predicated region
  $region42: #{pack_chi_head_forward.1} parent=0 // pred_check
    _
  $region43: #{pack_chi_head_forward.1} parent=0 // pred_check_branch
    %1404 = sbr.rel (0) target = $region45
  $region44: #{pack_chi_head_forward.1} parent=0 // pred_region
    _
  $region45: #{pack_chi_head_forward.1} parent=0 // pred_fallthru
    _
  // Predicated region
  $region46: #{pack_chi_head_forward.1} parent=0 // pred_check
    _
  $region47: #{pack_chi_head_forward.1} parent=0 // pred_check_branch
    %1406 = sbr.rel (0) target = $region49
  $region48: #{pack_chi_head_forward.1} parent=0 // pred_region
    _
  $region49: #{pack_chi_head_forward.1} parent=0 // pred_fallthru
    _

</llo_original>
